<compile_context>
chip_gen: v7x
topology: tpu7x:2x2x1
jax: 0.10.0
libtpu: 0.0.40
codegen_flags: <defaults>
</compile_context>

<pallas_src>
import jax
import jax.numpy as jnp
import numpy as np
from jax.experimental import pallas as pl
from jax.experimental.pallas import tpu as pltpu

CP = 128  # padded channel width (lane-dense); every matmul / store uses 128 lanes


def gnn_kernel(x_ref, adj_ref, wf_ref, vec_ref, wl_ref, out_ref,
               acts_ref, stat_ref):
    """Grid = (pass, row_block); pass 0 = stage x, 1..3 = conv layers, 4 = output.

    acts_ref (3, B, N, CP) VMEM scratch, slot reuse:
        pass 0 : stage padded x into slot 2
        pass 1 : layer 0 reads slot 2 (x),  writes slot 0 (x1)
        pass 2 : layer 1 reads slot 0 (x1), writes slot 1 (x2)
        pass 3 : layer 2 reads slot 1 (x2), writes slot 2 (h3; overwrites dead x)
        pass 4 : reads slots 0/1/2, BN-normalizes h3 per slab on the fly.
    stat_ref (8, CP): rows 0/1 = running BN sum / sum-of-squares,
                      rows 2/3 = layer-2 BN scale / shift (consumed by pass 4).
    Padded lanes stay exactly zero end-to-end: x / weights / gamma / beta are
    zero-padded, so h = 0, mean = var = 0 and scale = shift = 0 on those lanes.
    """
    p = pl.program_id(0)
    r = pl.program_id(1)
    n_rb = pl.num_programs(1)

    B, tN, N = adj_ref.shape
    cp = out_ref.shape[-1]
    row0 = pl.multiple_of(r * tN, tN)
    inv_bn = 1.0 / float(B * N)

    # ---------------- pass 0: stage padded input features into slot 2 --------
    @pl.when(p == 0)
    def _():
        acts_ref.at[2][:, pl.ds(row0, tN), :] = x_ref[...]

    # ---------------- passes 1..3: one DenseSAGEConv row slab ----------------
    @pl.when((p >= 1) & (p <= 3))
    def _():
        slot_in = acts_ref.at[(p + 1) % 3]     # 1->2, 2->0, 3->1
        slot_out = acts_ref.at[p - 1]          # 1->0, 2->1, 3->2

        @pl.when(r == 0)
        def _():
            stat_ref[0:2, :] = jnp.zeros((2, cp), jnp.float32)

        # bf16 0/1 adjacency upcast once; degree row-sum + aggregation in f32.
        adj_blk = adj_ref[...].astype(jnp.float32)                  # (B, tN, N)
        inv_deg = 1.0 / jnp.maximum(
            jnp.sum(adj_blk, axis=-1, keepdims=True), 1.0)          # (B, tN, 1)

        prev = slot_in[...]                                         # (B, N, cp)
        agg = jnp.einsum("bij,bjc->bic", adj_blk, prev,
                         preferred_element_type=jnp.float32) * inv_deg
        x_rows = slot_in[:, pl.ds(row0, tN), :]                     # (B, tN, cp)
        # Two K=128 matmuls (no concat copy): rows [0:cp] of wf = W_rel^T,
        # rows [cp:2cp] = W_root^T.
        h = (jnp.dot(agg.reshape(B * tN, cp), wf_ref[0:cp, :],
                     preferred_element_type=jnp.float32)
             + jnp.dot(x_rows.reshape(B * tN, cp), wf_ref[cp:2 * cp, :],
                       preferred_element_type=jnp.float32))
        h = jnp.maximum(h + vec_ref[0:1, :], 0.0)                   # bias + ReLU
        slot_out[:, pl.ds(row0, tN), :] = h.reshape(B, tN, cp)

        # Incremental BN statistics (hidden under the MXU-bound slab compute).
        stat_ref[0:1, :] += jnp.sum(h, axis=0, keepdims=True)
        stat_ref[1:2, :] += jnp.sum(h * h, axis=0, keepdims=True)

        # Layer boundary: finalize the BN affine from the accumulators.
        @pl.when(r == n_rb - 1)
        def _():
            mean = stat_ref[0:1, :] * inv_bn
            var = jnp.maximum(stat_ref[1:2, :] * inv_bn - mean * mean, 0.0)
            scale = vec_ref[1:2, :] * jax.lax.rsqrt(var + 1e-5)     # gamma folded
            shift = vec_ref[2:3, :] - mean * scale

            @pl.when(p <= 2)   # layers 0/1: next conv reads them -> normalize
            def _():           # in place, slabbed to cap transient VMEM.
                def body(i, c):
                    i0 = pl.multiple_of(i * tN, tN)
                    blk = slot_out[:, pl.ds(i0, tN), :]
                    slot_out[:, pl.ds(i0, tN), :] = blk * scale + shift
                    return c
                jax.lax.fori_loop(0, n_rb, body, 0)

            @pl.when(p == 3)   # layer 2: defer normalization to the output pass
            def _():
                stat_ref[2:3, :] = scale
                stat_ref[3:4, :] = shift

    # ------- pass 4: BN(x3) + Linear(concat) + ReLU per slab, streamed out ---
    @pl.when(p == 4)
    def _():
        x1 = acts_ref.at[0][:, pl.ds(row0, tN), :].reshape(B * tN, cp)
        x2 = acts_ref.at[1][:, pl.ds(row0, tN), :].reshape(B * tN, cp)
        h3 = acts_ref.at[2][:, pl.ds(row0, tN), :].reshape(B * tN, cp)
        x3 = h3 * stat_ref[2:3, :] + stat_ref[3:4, :]
        y = (jnp.dot(x1, wl_ref[0], preferred_element_type=jnp.float32)
             + jnp.dot(x2, wl_ref[1], preferred_element_type=jnp.float32)
             + jnp.dot(x3, wl_ref[2], preferred_element_type=jnp.float32)
             + vec_ref[3:4, :])                                    # final bias
        out_ref[...] = jnp.maximum(y, 0.0).reshape(B, tN, cp).astype(out_ref.dtype)


# ----------------------------------------------------------------------------
# Wrapper: parameter packing / padding, VMEM-budget-aware tiling, grid + specs.
# ----------------------------------------------------------------------------
def _pad_rows_cols(a, rows, cols):
    out = jnp.zeros((rows, cols), jnp.float32)
    return out.at[: a.shape[0], : a.shape[1]].set(a.astype(jnp.float32))


def _pad_vec(v, n):
    out = jnp.zeros((n,), jnp.float32)
    return out.at[: v.shape[0]].set(v.astype(jnp.float32))


def _vmem_limit_bytes():
    # Per-generation limit with headroom for compiler-internal scratch:
    # v7x (64 MiB physical) -> ~54 MiB, v5e/v6e (128 MiB) -> ~108 MiB.
    try:
        cap = int(pltpu.get_tpu_info().vmem_capacity_bytes)
    except Exception:
        cap = 64 * 1024 * 1024      # conservative fallback (v7x-sized)
    return max(min(int(cap * 0.85), cap - (8 << 20)), 32 * 1024 * 1024)


def _pick_row_tile(B, N, fixed_bytes, budget):
    """Largest row tile (multiple of 16, fallback 8) dividing N that fits VMEM."""
    def slab_bytes(t):
        return (2 * B * t * N * 2      # double-buffered bf16 adjacency slabs
                + B * t * N * 4        # in-kernel f32 upcast transient
                + 2 * B * t * CP * 4   # double-buffered x-feature slabs
                + 2 * B * t * CP * 4   # double-buffered output slabs
                + 4 * B * t * CP * 4)  # agg / h / misc per-slab temporaries

    avail = budget - fixed_bytes
    cands16 = [t for t in range(16, N + 1, 16) if N % t == 0]
    cands8 = [t for t in range(8, N + 1, 8) if N % t == 0]
    for cands in (cands16, cands8):
        for t in sorted(cands, reverse=True):
            if slab_bytes(t) <= avail:
                return t
    if cands8:
        return cands8[0]
    return N   # N not a multiple of 8: single full-extent slab


def gnn_forward(x, adj, params, hidden_channels, out_channels, *, row_tile=None):
    B, N, cin = x.shape
    H, O = hidden_channels, out_channels

    vmem_limit = _vmem_limit_bytes()
    # Persistent VMEM: 3 activation slots + a possible full x_prev
    # materialization for the aggregation operand + weight blocks + stats.
    fixed = (3 * B * N * CP * 4 + B * N * CP * 4
             + 2 * (2 * CP * CP * 4) + 2 * (8 * CP * 4)
             + 2 * (3 * CP * CP * 4) + 8 * CP * 4 + (1 << 20))
    if row_tile is None:
        row_tile = _pick_row_tile(B, N, fixed, vmem_limit - (2 << 20))
    assert N % row_tile == 0, "row_tile must divide N"
    n_rb = N // row_tile
    LAST = n_rb - 1

    # Zero-padded, lane-dense operands (last dim = 128).
    xp = jnp.zeros((B, N, CP), jnp.float32).at[:, :, :cin].set(x.astype(jnp.float32))
    adjb = adj.astype(jnp.bfloat16)      # 0/1 adjacency is exact in bf16

    def fused_conv_w(w_rel, w_root):     # torch layout: (out, in)
        wf = jnp.zeros((2 * CP, CP), jnp.float32)
        wf = wf.at[: w_rel.shape[1], : w_rel.shape[0]].set(w_rel.T)
        wf = wf.at[CP: CP + w_root.shape[1], : w_root.shape[0]].set(w_root.T)
        return wf

    wf = jnp.stack([
        fused_conv_w(params["w1_rel"], params["w1_root"]),
        fused_conv_w(params["w2_rel"], params["w2_root"]),
        fused_conv_w(params["w3_rel"], params["w3_root"]),
    ])                                   # (3, 2*CP, CP)

    # Per-layer small vectors packed into one (3, 8, CP) block:
    #   row 0 = conv bias, row 1 = BN gamma, row 2 = BN beta,
    #   row 3 (layer-2 block only) = final Linear bias.
    vecs = jnp.zeros((3, 8, CP), jnp.float32)
    for k, (b, g, be) in enumerate([
        (params["b1_rel"], params["g1"], params["be1"]),
        (params["b2_rel"], params["g2"], params["be2"]),
        (params["b3_rel"], params["g3"], params["be3"]),
    ]):
        vecs = vecs.at[k, 0].set(_pad_vec(b, CP))
        vecs = vecs.at[k, 1].set(_pad_vec(g, CP))
        vecs = vecs.at[k, 2].set(_pad_vec(be, CP))
    vecs = vecs.at[2, 3].set(_pad_vec(params["b_lin"], CP))

    # Final Linear split into three (CP, CP) blocks (no lane-misaligned concat).
    wl_t = params["w_lin"]               # (O, 2H + O)
    wl = jnp.stack([
        _pad_rows_cols(wl_t[:, :H].T, CP, CP),
        _pad_rows_cols(wl_t[:, H:2 * H].T, CP, CP),
        _pad_rows_cols(wl_t[:, 2 * H:].T, CP, CP),
    ])                                   # (3, CP, CP)

    # Index maps (boolean-weighted arithmetic keeps them pure scalar ops):
    #  - x streamed only during the staging pass, pinned afterwards,
    #  - adjacency streamed during the 3 conv passes, pinned otherwise,
    #  - per-layer weights clamped to the layer index,
    #  - output slab advances only during the output pass.
    def x_map(p, r):
        return (0, r * (p == 0) + LAST * (p != 0), 0)

    def adj_map(p, r):
        return (0, r * ((p >= 1) & (p <= 3)) + LAST * (p == 4), 0)

    def w_map(p, r):
        return (jnp.clip(p - 1, 0, 2), 0, 0)

    def out_map(p, r):
        return (0, r * (p == 4), 0)

    flops = (3 * 2 * B * N * N * CP            # adj @ x aggregation, 3 layers
             + 3 * 2 * B * N * (2 * CP) * CP   # rel/root matmuls, 3 layers
             + 2 * B * N * 3 * CP * CP)        # final linear (3 blocks)
    bytes_accessed = int(3 * B * N * N * 2 + 2 * B * N * CP * 4
                         + wf.size * 4 + wl.size * 4 + vecs.size * 4)
    cost = pl.CostEstimate(flops=int(flops),
                           transcendentals=int(3 * CP + 3 * B * N),
                           bytes_accessed=bytes_accessed)

    out_pad = pl.pallas_call(
        gnn_kernel,
        out_shape=jax.ShapeDtypeStruct((B, N, CP), jnp.float32),
        grid_spec=pltpu.PrefetchScalarGridSpec(
            num_scalar_prefetch=0,
            grid=(5, n_rb),                      # (pass, row block)
            in_specs=[
                # padded node features, streamed once during the staging pass
                pl.BlockSpec((B, row_tile, CP), x_map),
                # bf16 adjacency streamed as (B, row_tile, N) row slabs
                pl.BlockSpec((B, row_tile, N), adj_map),
                # per-layer fused conv weight, re-fetched only on layer change
                pl.BlockSpec((None, 2 * CP, CP), w_map),
                # per-layer packed bias/gamma/beta (+ final bias) block
                pl.BlockSpec((None, 8, CP), w_map),
                # final-linear weight blocks, resident
                pl.BlockSpec((3, CP, CP), lambda p, r: (0, 0, 0)),
            ],
            out_specs=pl.BlockSpec((B, row_tile, CP), out_map),
            scratch_shapes=[
                pltpu.VMEM((3, B, N, CP), jnp.float32),   # activation slots
                pltpu.VMEM((8, CP), jnp.float32),         # BN sum/sumsq + scale/shift
            ],
        ),
        compiler_params=pltpu.CompilerParams(
            # BatchNorm couples every row block and layers are sequential, and
            # scratch carries state across both axes -> strictly sequential.
            dimension_semantics=("arbitrary", "arbitrary"),
            vmem_limit_bytes=vmem_limit,
        ),
        cost_estimate=cost,
    )(xp, adjb, wf, vecs, wl)

    return out_pad[:, :, :O]


# ----------------------------------------------------------------------------
# Parameters + plain-JAX reference for the correctness check.
# ----------------------------------------------------------------------------
def init_params(key, in_channels, hidden_channels, out_channels):
    ks = jax.random.split(key, 12)
    s = 0.1
    p = {
        "w1_rel": jax.random.normal(ks[0], (hidden_channels, in_channels), jnp.float32) * s,
        "b1_rel": jax.random.normal(ks[1], (hidden_channels,), jnp.float32) * s,
        "w1_root": jax.random.normal(ks[2], (hidden_channels, in_channels), jnp.float32) * s,
        "w2_rel": jax.random.normal(ks[3], (hidden_channels, hidden_channels), jnp.float32) * s,
        "b2_rel": jax.random.normal(ks[4], (hidden_channels,), jnp.float32) * s,
        "w2_root": jax.random.normal(ks[5], (hidden_channels, hidden_channels), jnp.float32) * s,
        "w3_rel": jax.random.normal(ks[6], (out_channels, hidden_channels), jnp.float32) * s,
        "b3_rel": jax.random.normal(ks[7], (out_channels,), jnp.float32) * s,
        "w3_root": jax.random.normal(ks[8], (out_channels, hidden_channels), jnp.float32) * s,
        "g1": jnp.ones((hidden_channels,), jnp.float32) * 1.1,
        "be1": jnp.full((hidden_channels,), 0.05, jnp.float32),
        "g2": jnp.ones((hidden_channels,), jnp.float32) * 0.9,
        "be2": jnp.full((hidden_channels,), -0.05, jnp.float32),
        "g3": jnp.ones((out_channels,), jnp.float32) * 1.2,
        "be3": jnp.full((out_channels,), 0.02, jnp.float32),
        "w_lin": jax.random.normal(ks[9], (out_channels, 2 * hidden_channels + out_channels),
                                   jnp.float32) * s,
        "b_lin": jax.random.normal(ks[10], (out_channels,), jnp.float32) * s,
    }
    return p


def gnn_reference(x, adj, params):
    deg = jnp.maximum(jnp.sum(adj, axis=-1, keepdims=True), 1.0)

    def sage(xi, wr, br, wo):
        agg = jnp.einsum("bij,bjc->bic", adj, xi) / deg
        return jnp.einsum("bic,oc->bio", agg, wr) + br + jnp.einsum("bic,oc->bio", xi, wo)

    def relu_bn(h, g, b):
        B, N, C = h.shape
        f = jnp.maximum(h, 0.0).reshape(B * N, C)
        m = jnp.mean(f, axis=0, keepdims=True)
        v = jnp.mean((f - m) ** 2, axis=0, keepdims=True)
        return (((f - m) / jnp.sqrt(v + 1e-5)) * g + b).reshape(B, N, C)

    x1 = relu_bn(sage(x, params["w1_rel"], params["b1_rel"], params["w1_root"]),
                 params["g1"], params["be1"])
    x2 = relu_bn(sage(x1, params["w2_rel"], params["b2_rel"], params["w2_root"]),
                 params["g2"], params["be2"])
    x3 = relu_bn(sage(x2, params["w3_rel"], params["b3_rel"], params["w3_root"]),
                 params["g3"], params["be3"])
    xc = jnp.concatenate([x1, x2, x3], axis=-1)
    return jnp.maximum(jnp.einsum("bnc,oc->bno", xc, params["w_lin"]) + params["b_lin"], 0.0)


if __name__ == "__main__":
    B, N = 2, 16
    in_channels, hidden_channels, out_channels = 4, 32, 16

    key = jax.random.PRNGKey(0)
    kx, kadj, kp = jax.random.split(key, 3)
    x = jax.random.normal(kx, (B, N, in_channels), jnp.float32)
    adj = (jax.random.uniform(kadj, (B, N, N)) < 0.3).astype(jnp.float32)
    adj = jnp.maximum(adj, jnp.transpose(adj, (0, 2, 1)))  # symmetric 0/1 adjacency

    params = init_params(kp, in_channels, hidden_channels, out_channels)

    out = gnn_forward(x, adj, params, hidden_channels, out_channels)
    out = jax.block_until_ready(out)

    ref = jax.block_until_ready(gnn_reference(x, adj, params))
    assert out.shape == (B, N, out_channels)
    np.testing.assert_allclose(np.asarray(out), np.asarray(ref), rtol=1e-4, atol=1e-4)

    print("KERNEL_OK")
</pallas_src>

<mosaic_0001>
module attributes {stable_mosaic.version = 11 : i64} {
  func.func @gnn_kernel(%arg0: i32, %arg1: i32, %arg2: memref<2x16x128xf32, #tpu.memory_space<vmem>>, %arg3: memref<2x16x16xbf16, #tpu.memory_space<vmem>>, %arg4: memref<1x256x128xf32, #tpu.memory_space<vmem>>, %arg5: memref<1x8x128xf32, #tpu.memory_space<vmem>>, %arg6: memref<3x128x128xf32, #tpu.memory_space<vmem>>, %arg7: memref<2x16x128xf32, #tpu.memory_space<vmem>>, %arg8: memref<3x2x16x128xf32, #tpu.memory_space<vmem>>, %arg9: memref<8x128xf32, #tpu.memory_space<vmem>>) attributes {dimension_semantics = [#tpu.dimension_semantics<arbitrary>, #tpu.dimension_semantics<arbitrary>], iteration_bounds = array<i64: 5, 1>, scalar_prefetch = 0 : i64, scratch_operands = 2 : i64, tpu.core_type = #tpu.core_type<tc>, window_params = [{transform_indices = @transform_0, window_bounds = array<i64: 2, 16, 128>}, {transform_indices = @transform_1, window_bounds = array<i64: 2, 16, 16>}, {transform_indices = @transform_2, window_bounds = array<i64: 1, 256, 128>}, {transform_indices = @transform_3, window_bounds = array<i64: 1, 8, 128>}, {pipeline_mode = #tpu.pipeline_mode<synchronous>, transform_indices = @transform_4, window_bounds = array<i64: 3, 128, 128>}, {transform_indices = @transform_5, window_bounds = array<i64: 2, 16, 128>}]} {
    %c16_i32 = arith.constant 16 : i32
    %0 = arith.muli %arg1, %c16_i32 : i32
    %1 = tpu.assume_multiple %0, 16 : i32
    %c0_i32 = arith.constant 0 : i32
    %2 = arith.cmpi eq, %arg0, %c0_i32 : i32
    %3 = arith.extui %2 : i1 to i32
    %c0_i32_0 = arith.constant 0 : i32
    %4 = arith.cmpi ne, %3, %c0_i32_0 : i32
    scf.if %4 {
      %c0 = arith.constant 0 : index
      %c0_3 = arith.constant 0 : index
      %c0_4 = arith.constant 0 : index
      %13 = vector.load %arg2[%c0, %c0_3, %c0_4] : memref<2x16x128xf32, #tpu.memory_space<vmem>>, vector<2x16x128xf32>
      %c2_i32 = arith.constant 2 : i32
      %c0_i32_5 = arith.constant 0 : i32
      %c0_i32_6 = arith.constant 0 : i32
      %c0_i32_7 = arith.constant 0 : i32
      %14 = tpu.memref_slice %arg8[%c2_i32, %c0_i32_5, %c0_i32_6, %c0_i32_7] : memref<3x2x16x128xf32, #tpu.memory_space<vmem>> -> memref<1x2x16x128xf32, #tpu.memory_space<vmem>>
      %15 = tpu.memref_squeeze %14 : memref<1x2x16x128xf32, #tpu.memory_space<vmem>> -> memref<2x16x128xf32, #tpu.memory_space<vmem>>
      %c0_8 = arith.constant 0 : index
      %16 = arith.index_cast %1 : i32 to index
      %c0_9 = arith.constant 0 : index
      %17 = vector.load %15[%c0_8, %16, %c0_9] : memref<2x16x128xf32, #tpu.memory_space<vmem>>, vector<2x16x128xf32>
      tpu.vector_store %15[%c0_8, %16, %c0_9], %13 {strides = array<i32>} : memref<2x16x128xf32, #tpu.memory_space<vmem>>, vector<2x16x128xf32>,
    } else {
    }
    %c1_i32 = arith.constant 1 : i32
    %5 = arith.cmpi sge, %arg0, %c1_i32 : i32
    %c3_i32 = arith.constant 3 : i32
    %6 = arith.cmpi sle, %arg0, %c3_i32 : i32
    %7 = arith.andi %5, %6 : i1
    %8 = arith.extui %7 : i1 to i32
    %c0_i32_1 = arith.constant 0 : i32
    %9 = arith.cmpi ne, %8, %c0_i32_1 : i32
    scf.if %9 {
      %c1_i32_3 = arith.constant 1 : i32
      %13 = arith.addi %arg0, %c1_i32_3 : i32
      %c3_i32_4 = arith.constant 3 : i32
      %c0_i32_5 = arith.constant 0 : i32
      %14 = arith.cmpi eq, %c3_i32_4, %c0_i32_5 : i32
      %c1_i32_6 = arith.constant 1 : i32
      %15 = arith.select %14, %c1_i32_6, %c3_i32_4 : i32
      %16 = arith.remsi %13, %15 : i32
      %c0_i32_7 = arith.constant 0 : i32
      %17 = arith.cmpi ne, %16, %c0_i32_7 : i32
      %c0_i32_8 = arith.constant 0 : i32
      %18 = arith.cmpi slt, %16, %c0_i32_8 : i32
      %c0_i32_9 = arith.constant 0 : i32
      %19 = arith.cmpi slt, %15, %c0_i32_9 : i32
      %20 = arith.xori %18, %19 : i1
      %21 = arith.andi %20, %17 : i1
      %22 = arith.addi %16, %15 : i32
      %23 = arith.select %21, %22, %16 : i32
      %c1_i32_10 = arith.constant 1 : i32
      %24 = arith.subi %arg0, %c1_i32_10 : i32
      %c0_i32_11 = arith.constant 0 : i32
      %25 = arith.cmpi eq, %arg1, %c0_i32_11 : i32
      %26 = arith.extui %25 : i1 to i32
      %c0_i32_12 = arith.constant 0 : i32
      %27 = arith.cmpi ne, %26, %c0_i32_12 : i32
      scf.if %27 {
        %cst_53 = arith.constant 0.000000e+00 : f32
        %80 = vector.broadcast %cst_53 : f32 to vector<2x128xf32>
        %c0_54 = arith.constant 0 : index
        %c0_55 = arith.constant 0 : index
        %81 = vector.load %arg9[%c0_54, %c0_55] : memref<8x128xf32, #tpu.memory_space<vmem>>, vector<2x128xf32>
        tpu.vector_store %arg9[%c0_54, %c0_55], %80 {strides = array<i32>} : memref<8x128xf32, #tpu.memory_space<vmem>>, vector<2x128xf32>,
      } else {
      }
      %c0 = arith.constant 0 : index
      %c0_13 = arith.constant 0 : index
      %c0_14 = arith.constant 0 : index
      %28 = vector.load %arg3[%c0, %c0_13, %c0_14] : memref<2x16x16xbf16, #tpu.memory_space<vmem>>, vector<2x16x16xbf16>
      %29 = arith.extf %28 : vector<2x16x16xbf16> to vector<2x16x16xf32>
      %cst = arith.constant dense<0.000000e+00> : vector<2x16xf32>
      %30 = vector.multi_reduction <add>, %29, %cst [2] : vector<2x16x16xf32> to vector<2x16xf32>
      %31 = vector.shape_cast %30 : vector<2x16xf32> to vector<2x16x1xf32>
      %cst_15 = arith.constant 1.000000e+00 : f32
      %32 = vector.broadcast %cst_15 : f32 to vector<2x16x1xf32>
      %33 = arith.maximumf %31, %32 : vector<2x16x1xf32>
      %cst_16 = arith.constant 1.000000e+00 : f32
      %34 = vector.broadcast %cst_16 : f32 to vector<2x16x1xf32>
      %35 = arith.divf %34, %33 : vector<2x16x1xf32>
      %36 = arith.index_cast %23 : i32 to index
      %c0_17 = arith.constant 0 : index
      %c0_18 = arith.constant 0 : index
      %c0_19 = arith.constant 0 : index
      %37 = vector.load %arg8[%36, %c0_17, %c0_18, %c0_19] : memref<3x2x16x128xf32, #tpu.memory_space<vmem>>, vector<1x2x16x128xf32>
      %38 = vector.shape_cast %37 : vector<1x2x16x128xf32> to vector<2x16x128xf32>
      "tpu.trace_start"() <{level = 10 : i32, message = "bij,bjc->bic"}> : () -> ()
      %cst_20 = arith.constant dense<0.000000e+00> : vector<2x16x128xf32>
      %39 = tpu.matmul %29, %38, %cst_20 {dimension_numbers = #tpu.dot_dimension_numbers<[2], [1], [1], [2], [0, 0, 0, 1, 1, 2], [0], [0]>} : vector<2x16x16xf32>, vector<2x16x128xf32>, vector<2x16x128xf32> -> vector<2x16x128xf32>
      "tpu.trace_stop"() : () -> ()
      %40 = vector.broadcast %35 : vector<2x16x1xf32> to vector<2x16x128xf32>
      %41 = arith.mulf %39, %40 : vector<2x16x128xf32>
      %c0_i32_21 = arith.constant 0 : i32
      %c0_i32_22 = arith.constant 0 : i32
      %c0_i32_23 = arith.constant 0 : i32
      %42 = tpu.memref_slice %arg8[%23, %c0_i32_21, %c0_i32_22, %c0_i32_23] : memref<3x2x16x128xf32, #tpu.memory_space<vmem>> -> memref<1x2x16x128xf32, #tpu.memory_space<vmem>>
      %43 = tpu.memref_squeeze %42 : memref<1x2x16x128xf32, #tpu.memory_space<vmem>> -> memref<2x16x128xf32, #tpu.memory_space<vmem>>
      %c0_24 = arith.constant 0 : index
      %44 = arith.index_cast %1 : i32 to index
      %c0_25 = arith.constant 0 : index
      %45 = vector.load %43[%c0_24, %44, %c0_25] : memref<2x16x128xf32, #tpu.memory_space<vmem>>, vector<2x16x128xf32>
      %46 = vector.shape_cast %41 : vector<2x16x128xf32> to vector<32x128xf32>
      %c0_26 = arith.constant 0 : index
      %c0_27 = arith.constant 0 : index
      %c0_28 = arith.constant 0 : index
      %47 = vector.load %arg4[%c0_26, %c0_27, %c0_28] : memref<1x256x128xf32, #tpu.memory_space<vmem>>, vector<1x128x128xf32>
      %48 = vector.shape_cast %47 : vector<1x128x128xf32> to vector<128x128xf32>
      %cst_29 = arith.constant dense<0.000000e+00> : vector<32x128xf32>
      %49 = tpu.matmul %46, %48, %cst_29 {dimension_numbers = #tpu.dot_dimension_numbers<[1], [0], [0], [1], [0, 0, 1, 1], [], []>} : vector<32x128xf32>, vector<128x128xf32>, vector<32x128xf32> -> vector<32x128xf32>
      %50 = vector.shape_cast %45 : vector<2x16x128xf32> to vector<32x128xf32>
      %c0_30 = arith.constant 0 : index
      %c128 = arith.constant 128 : index
      %c0_31 = arith.constant 0 : index
      %51 = vector.load %arg4[%c0_30, %c128, %c0_31] : memref<1x256x128xf32, #tpu.memory_space<vmem>>, vector<1x128x128xf32>
      %52 = vector.shape_cast %51 : vector<1x128x128xf32> to vector<128x128xf32>
      %cst_32 = arith.constant dense<0.000000e+00> : vector<32x128xf32>
      %53 = tpu.matmul %50, %52, %cst_32 {dimension_numbers = #tpu.dot_dimension_numbers<[1], [0], [0], [1], [0, 0, 1, 1], [], []>} : vector<32x128xf32>, vector<128x128xf32>, vector<32x128xf32> -> vector<32x128xf32>
      %54 = arith.addf %49, %53 : vector<32x128xf32>
      %c0_33 = arith.constant 0 : index
      %c0_34 = arith.constant 0 : index
      %c0_35 = arith.constant 0 : index
      %55 = vector.load %arg5[%c0_33, %c0_34, %c0_35] : memref<1x8x128xf32, #tpu.memory_space<vmem>>, vector<1x1x128xf32>
      %56 = vector.shape_cast %55 : vector<1x1x128xf32> to vector<1x128xf32>
      %57 = vector.broadcast %56 : vector<1x128xf32> to vector<32x128xf32>
      %58 = arith.addf %54, %57 : vector<32x128xf32>
      %cst_36 = arith.constant 0.000000e+00 : f32
      %59 = vector.broadcast %cst_36 : f32 to vector<32x128xf32>
      %60 = arith.maximumf %58, %59 : vector<32x128xf32>
      %61 = vector.shape_cast %60 : vector<32x128xf32> to vector<2x16x128xf32>
      %c0_i32_37 = arith.constant 0 : i32
      %c0_i32_38 = arith.constant 0 : i32
      %c0_i32_39 = arith.constant 0 : i32
      %62 = tpu.memref_slice %arg8[%24, %c0_i32_37, %c0_i32_38, %c0_i32_39] : memref<3x2x16x128xf32, #tpu.memory_space<vmem>> -> memref<1x2x16x128xf32, #tpu.memory_space<vmem>>
      %63 = tpu.memref_squeeze %62 : memref<1x2x16x128xf32, #tpu.memory_space<vmem>> -> memref<2x16x128xf32, #tpu.memory_space<vmem>>
      %c0_40 = arith.constant 0 : index
      %64 = arith.index_cast %1 : i32 to index
      %c0_41 = arith.constant 0 : index
      %65 = vector.load %63[%c0_40, %64, %c0_41] : memref<2x16x128xf32, #tpu.memory_space<vmem>>, vector<2x16x128xf32>
      tpu.vector_store %63[%c0_40, %64, %c0_41], %61 {strides = array<i32>} : memref<2x16x128xf32, #tpu.memory_space<vmem>>, vector<2x16x128xf32>,
      %c0_42 = arith.constant 0 : index
      %c0_43 = arith.constant 0 : index
      %66 = vector.load %arg9[%c0_42, %c0_43] : memref<8x128xf32, #tpu.memory_space<vmem>>, vector<1x128xf32>
      %cst_44 = arith.constant dense<0.000000e+00> : vector<128xf32>
      %67 = vector.multi_reduction <add>, %60, %cst_44 [0] : vector<32x128xf32> to vector<128xf32>
      %68 = vector.shape_cast %67 : vector<128xf32> to vector<1x128xf32>
      %69 = arith.addf %66, %68 : vector<1x128xf32>
      %c0_45 = arith.constant 0 : index
      %c0_46 = arith.constant 0 : index
      %70 = vector.load %arg9[%c0_45, %c0_46] : memref<8x128xf32, #tpu.memory_space<vmem>>, vector<1x128xf32>
      tpu.vector_store %arg9[%c0_45, %c0_46], %69 {strides = array<i32>} : memref<8x128xf32, #tpu.memory_space<vmem>>, vector<1x128xf32>,
      %c1 = arith.constant 1 : index
      %c0_47 = arith.constant 0 : index
      %71 = vector.load %arg9[%c1, %c0_47] : memref<8x128xf32, #tpu.memory_space<vmem>>, vector<1x128xf32>
      %72 = arith.mulf %60, %60 : vector<32x128xf32>
      %cst_48 = arith.constant dense<0.000000e+00> : vector<128xf32>
      %73 = vector.multi_reduction <add>, %72, %cst_48 [0] : vector<32x128xf32> to vector<128xf32>
      %74 = vector.shape_cast %73 : vector<128xf32> to vector<1x128xf32>
      %75 = arith.addf %71, %74 : vector<1x128xf32>
      %c1_49 = arith.constant 1 : index
      %c0_50 = arith.constant 0 : index
      %76 = vector.load %arg9[%c1_49, %c0_50] : memref<8x128xf32, #tpu.memory_space<vmem>>, vector<1x128xf32>
      tpu.vector_store %arg9[%c1_49, %c0_50], %75 {strides = array<i32>} : memref<8x128xf32, #tpu.memory_space<vmem>>, vector<1x128xf32>,
      %c0_i32_51 = arith.constant 0 : i32
      %77 = arith.cmpi eq, %arg1, %c0_i32_51 : i32
      %78 = arith.extui %77 : i1 to i32
      %c0_i32_52 = arith.constant 0 : i32
      %79 = arith.cmpi ne, %78, %c0_i32_52 : i32
      scf.if %79 {
        %c0_53 = arith.constant 0 : index
        %c0_54 = arith.constant 0 : index
        %80 = vector.load %arg9[%c0_53, %c0_54] : memref<8x128xf32, #tpu.memory_space<vmem>>, vector<1x128xf32>
        %cst_55 = arith.constant 3.125000e-02 : f32
        %81 = vector.broadcast %cst_55 : f32 to vector<1x128xf32>
        %82 = arith.mulf %80, %81 : vector<1x128xf32>
        %c1_56 = arith.constant 1 : index
        %c0_57 = arith.constant 0 : index
        %83 = vector.load %arg9[%c1_56, %c0_57] : memref<8x128xf32, #tpu.memory_space<vmem>>, vector<1x128xf32>
        %cst_58 = arith.constant 3.125000e-02 : f32
        %84 = vector.broadcast %cst_58 : f32 to vector<1x128xf32>
        %85 = arith.mulf %83, %84 : vector<1x128xf32>
        %86 = arith.mulf %82, %82 : vector<1x128xf32>
        %87 = arith.subf %85, %86 : vector<1x128xf32>
        %cst_59 = arith.constant 0.000000e+00 : f32
        %88 = vector.broadcast %cst_59 : f32 to vector<1x128xf32>
        %89 = arith.maximumf %87, %88 : vector<1x128xf32>
        %c0_60 = arith.constant 0 : index
        %c1_61 = arith.constant 1 : index
        %c0_62 = arith.constant 0 : index
        %90 = vector.load %arg5[%c0_60, %c1_61, %c0_62] : memref<1x8x128xf32, #tpu.memory_space<vmem>>, vector<1x1x128xf32>
        %91 = vector.shape_cast %90 : vector<1x1x128xf32> to vector<1x128xf32>
        %cst_63 = arith.constant 9.99999974E-6 : f32
        %92 = vector.broadcast %cst_63 : f32 to vector<1x128xf32>
        %93 = arith.addf %89, %92 : vector<1x128xf32>
        %94 = math.rsqrt %93 : vector<1x128xf32>
        %95 = arith.mulf %91, %94 : vector<1x128xf32>
        %c0_64 = arith.constant 0 : index
        %c2 = arith.constant 2 : index
        %c0_65 = arith.constant 0 : index
        %96 = vector.load %arg5[%c0_64, %c2, %c0_65] : memref<1x8x128xf32, #tpu.memory_space<vmem>>, vector<1x1x128xf32>
        %97 = vector.shape_cast %96 : vector<1x1x128xf32> to vector<1x128xf32>
        %98 = arith.mulf %82, %95 : vector<1x128xf32>
        %99 = arith.subf %97, %98 : vector<1x128xf32>
        %c2_i32 = arith.constant 2 : i32
        %100 = arith.cmpi sle, %arg0, %c2_i32 : i32
        %101 = arith.extui %100 : i1 to i32
        %c0_i32_66 = arith.constant 0 : i32
        %102 = arith.cmpi ne, %101, %c0_i32_66 : i32
        scf.if %102 {
          %c0_i32_69 = arith.constant 0 : i32
          %c16_i32_70 = arith.constant 16 : i32
          %106 = arith.muli %c0_i32_69, %c16_i32_70 : i32
          %107 = tpu.assume_multiple %106, 16 : i32
          %c0_i32_71 = arith.constant 0 : i32
          %c0_i32_72 = arith.constant 0 : i32
          %c0_i32_73 = arith.constant 0 : i32
          %108 = tpu.memref_slice %arg8[%24, %c0_i32_71, %c0_i32_72, %c0_i32_73] : memref<3x2x16x128xf32, #tpu.memory_space<vmem>> -> memref<1x2x16x128xf32, #tpu.memory_space<vmem>>
          %109 = tpu.memref_squeeze %108 : memref<1x2x16x128xf32, #tpu.memory_space<vmem>> -> memref<2x16x128xf32, #tpu.memory_space<vmem>>
          %c0_74 = arith.constant 0 : index
          %110 = arith.index_cast %107 : i32 to index
          %c0_75 = arith.constant 0 : index
          %111 = vector.load %109[%c0_74, %110, %c0_75] : memref<2x16x128xf32, #tpu.memory_space<vmem>>, vector<2x16x128xf32>
          %112 = vector.shape_cast %95 : vector<1x128xf32> to vector<1x1x128xf32>
          %113 = vector.broadcast %112 : vector<1x1x128xf32> to vector<2x16x128xf32>
          %114 = arith.mulf %111, %113 : vector<2x16x128xf32>
          %115 = vector.shape_cast %99 : vector<1x128xf32> to vector<1x1x128xf32>
          %116 = vector.broadcast %115 : vector<1x1x128xf32> to vector<2x16x128xf32>
          %117 = arith.addf %114, %116 : vector<2x16x128xf32>
          %c0_i32_76 = arith.constant 0 : i32
          %c0_i32_77 = arith.constant 0 : i32
          %c0_i32_78 = arith.constant 0 : i32
          %118 = tpu.memref_slice %arg8[%24, %c0_i32_76, %c0_i32_77, %c0_i32_78] : memref<3x2x16x128xf32, #tpu.memory_space<vmem>> -> memref<1x2x16x128xf32, #tpu.memory_space<vmem>>
          %119 = tpu.memref_squeeze %118 : memref<1x2x16x128xf32, #tpu.memory_space<vmem>> -> memref<2x16x128xf32, #tpu.memory_space<vmem>>
          %c0_79 = arith.constant 0 : index
          %120 = arith.index_cast %107 : i32 to index
          %c0_80 = arith.constant 0 : index
          %121 = vector.load %119[%c0_79, %120, %c0_80] : memref<2x16x128xf32, #tpu.memory_space<vmem>>, vector<2x16x128xf32>
          tpu.vector_store %119[%c0_79, %120, %c0_80], %117 {strides = array<i32>} : memref<2x16x128xf32, #tpu.memory_space<vmem>>, vector<2x16x128xf32>,
          %c1_i32_81 = arith.constant 1 : i32
        } else {
        }
        %c3_i32_67 = arith.constant 3 : i32
        %103 = arith.cmpi eq, %arg0, %c3_i32_67 : i32
        %104 = arith.extui %103 : i1 to i32
        %c0_i32_68 = arith.constant 0 : i32
        %105 = arith.cmpi ne, %104, %c0_i32_68 : i32
        scf.if %105 {
          %c2_69 = arith.constant 2 : index
          %c0_70 = arith.constant 0 : index
          %106 = vector.load %arg9[%c2_69, %c0_70] : memref<8x128xf32, #tpu.memory_space<vmem>>, vector<1x128xf32>
          tpu.vector_store %arg9[%c2_69, %c0_70], %95 {strides = array<i32>} : memref<8x128xf32, #tpu.memory_space<vmem>>, vector<1x128xf32>,
          %c3 = arith.constant 3 : index
          %c0_71 = arith.constant 0 : index
          %107 = vector.load %arg9[%c3, %c0_71] : memref<8x128xf32, #tpu.memory_space<vmem>>, vector<1x128xf32>
          tpu.vector_store %arg9[%c3, %c0_71], %99 {strides = array<i32>} : memref<8x128xf32, #tpu.memory_space<vmem>>, vector<1x128xf32>,
        } else {
        }
      } else {
      }
    } else {
    }
    %c4_i32 = arith.constant 4 : i32
    %10 = arith.cmpi eq, %arg0, %c4_i32 : i32
    %11 = arith.extui %10 : i1 to i32
    %c0_i32_2 = arith.constant 0 : i32
    %12 = arith.cmpi ne, %11, %c0_i32_2 : i32
    scf.if %12 {
      %c0_i32_3 = arith.constant 0 : i32
      %c0_i32_4 = arith.constant 0 : i32
      %c0_i32_5 = arith.constant 0 : i32
      %c0_i32_6 = arith.constant 0 : i32
      %13 = tpu.memref_slice %arg8[%c0_i32_3, %c0_i32_4, %c0_i32_5, %c0_i32_6] : memref<3x2x16x128xf32, #tpu.memory_space<vmem>> -> memref<1x2x16x128xf32, #tpu.memory_space<vmem>>
      %14 = tpu.memref_squeeze %13 : memref<1x2x16x128xf32, #tpu.memory_space<vmem>> -> memref<2x16x128xf32, #tpu.memory_space<vmem>>
      %c0 = arith.constant 0 : index
      %15 = arith.index_cast %1 : i32 to index
      %c0_7 = arith.constant 0 : index
      %16 = vector.load %14[%c0, %15, %c0_7] : memref<2x16x128xf32, #tpu.memory_space<vmem>>, vector<2x16x128xf32>
      %17 = vector.shape_cast %16 : vector<2x16x128xf32> to vector<32x128xf32>
      %c1_i32_8 = arith.constant 1 : i32
      %c0_i32_9 = arith.constant 0 : i32
      %c0_i32_10 = arith.constant 0 : i32
      %c0_i32_11 = arith.constant 0 : i32
      %18 = tpu.memref_slice %arg8[%c1_i32_8, %c0_i32_9, %c0_i32_10, %c0_i32_11] : memref<3x2x16x128xf32, #tpu.memory_space<vmem>> -> memref<1x2x16x128xf32, #tpu.memory_space<vmem>>
      %19 = tpu.memref_squeeze %18 : memref<1x2x16x128xf32, #tpu.memory_space<vmem>> -> memref<2x16x128xf32, #tpu.memory_space<vmem>>
      %c0_12 = arith.constant 0 : index
      %20 = arith.index_cast %1 : i32 to index
      %c0_13 = arith.constant 0 : index
      %21 = vector.load %19[%c0_12, %20, %c0_13] : memref<2x16x128xf32, #tpu.memory_space<vmem>>, vector<2x16x128xf32>
      %22 = vector.shape_cast %21 : vector<2x16x128xf32> to vector<32x128xf32>
      %c2_i32 = arith.constant 2 : i32
      %c0_i32_14 = arith.constant 0 : i32
      %c0_i32_15 = arith.constant 0 : i32
      %c0_i32_16 = arith.constant 0 : i32
      %23 = tpu.memref_slice %arg8[%c2_i32, %c0_i32_14, %c0_i32_15, %c0_i32_16] : memref<3x2x16x128xf32, #tpu.memory_space<vmem>> -> memref<1x2x16x128xf32, #tpu.memory_space<vmem>>
      %24 = tpu.memref_squeeze %23 : memref<1x2x16x128xf32, #tpu.memory_space<vmem>> -> memref<2x16x128xf32, #tpu.memory_space<vmem>>
      %c0_17 = arith.constant 0 : index
      %25 = arith.index_cast %1 : i32 to index
      %c0_18 = arith.constant 0 : index
      %26 = vector.load %24[%c0_17, %25, %c0_18] : memref<2x16x128xf32, #tpu.memory_space<vmem>>, vector<2x16x128xf32>
      %27 = vector.shape_cast %26 : vector<2x16x128xf32> to vector<32x128xf32>
      %c2 = arith.constant 2 : index
      %c0_19 = arith.constant 0 : index
      %28 = vector.load %arg9[%c2, %c0_19] : memref<8x128xf32, #tpu.memory_space<vmem>>, vector<1x128xf32>
      %29 = vector.broadcast %28 : vector<1x128xf32> to vector<32x128xf32>
      %30 = arith.mulf %27, %29 : vector<32x128xf32>
      %c3 = arith.constant 3 : index
      %c0_20 = arith.constant 0 : index
      %31 = vector.load %arg9[%c3, %c0_20] : memref<8x128xf32, #tpu.memory_space<vmem>>, vector<1x128xf32>
      %32 = vector.broadcast %31 : vector<1x128xf32> to vector<32x128xf32>
      %33 = arith.addf %30, %32 : vector<32x128xf32>
      %c0_21 = arith.constant 0 : index
      %c0_22 = arith.constant 0 : index
      %c0_23 = arith.constant 0 : index
      %34 = vector.load %arg6[%c0_21, %c0_22, %c0_23] : memref<3x128x128xf32, #tpu.memory_space<vmem>>, vector<1x128x128xf32>
      %35 = vector.shape_cast %34 : vector<1x128x128xf32> to vector<128x128xf32>
      %cst = arith.constant dense<0.000000e+00> : vector<32x128xf32>
      %36 = tpu.matmul %17, %35, %cst {dimension_numbers = #tpu.dot_dimension_numbers<[1], [0], [0], [1], [0, 0, 1, 1], [], []>} : vector<32x128xf32>, vector<128x128xf32>, vector<32x128xf32> -> vector<32x128xf32>
      %c1 = arith.constant 1 : index
      %c0_24 = arith.constant 0 : index
      %c0_25 = arith.constant 0 : index
      %37 = vector.load %arg6[%c1, %c0_24, %c0_25] : memref<3x128x128xf32, #tpu.memory_space<vmem>>, vector<1x128x128xf32>
      %38 = vector.shape_cast %37 : vector<1x128x128xf32> to vector<128x128xf32>
      %cst_26 = arith.constant dense<0.000000e+00> : vector<32x128xf32>
      %39 = tpu.matmul %22, %38, %cst_26 {dimension_numbers = #tpu.dot_dimension_numbers<[1], [0], [0], [1], [0, 0, 1, 1], [], []>} : vector<32x128xf32>, vector<128x128xf32>, vector<32x128xf32> -> vector<32x128xf32>
      %40 = arith.addf %36, %39 : vector<32x128xf32>
      %c2_27 = arith.constant 2 : index
      %c0_28 = arith.constant 0 : index
      %c0_29 = arith.constant 0 : index
      %41 = vector.load %arg6[%c2_27, %c0_28, %c0_29] : memref<3x128x128xf32, #tpu.memory_space<vmem>>, vector<1x128x128xf32>
      %42 = vector.shape_cast %41 : vector<1x128x128xf32> to vector<128x128xf32>
      %cst_30 = arith.constant dense<0.000000e+00> : vector<32x128xf32>
      %43 = tpu.matmul %33, %42, %cst_30 {dimension_numbers = #tpu.dot_dimension_numbers<[1], [0], [0], [1], [0, 0, 1, 1], [], []>} : vector<32x128xf32>, vector<128x128xf32>, vector<32x128xf32> -> vector<32x128xf32>
      %44 = arith.addf %40, %43 : vector<32x128xf32>
      %c0_31 = arith.constant 0 : index
      %c3_32 = arith.constant 3 : index
      %c0_33 = arith.constant 0 : index
      %45 = vector.load %arg5[%c0_31, %c3_32, %c0_33] : memref<1x8x128xf32, #tpu.memory_space<vmem>>, vector<1x1x128xf32>
      %46 = vector.shape_cast %45 : vector<1x1x128xf32> to vector<1x128xf32>
      %47 = vector.broadcast %46 : vector<1x128xf32> to vector<32x128xf32>
      %48 = arith.addf %44, %47 : vector<32x128xf32>
      %cst_34 = arith.constant 0.000000e+00 : f32
      %49 = vector.broadcast %cst_34 : f32 to vector<32x128xf32>
      %50 = arith.maximumf %48, %49 : vector<32x128xf32>
      %51 = vector.shape_cast %50 : vector<32x128xf32> to vector<2x16x128xf32>
      %c0_35 = arith.constant 0 : index
      %c0_36 = arith.constant 0 : index
      %c0_37 = arith.constant 0 : index
      %52 = vector.load %arg7[%c0_35, %c0_36, %c0_37] : memref<2x16x128xf32, #tpu.memory_space<vmem>>, vector<2x16x128xf32>
      tpu.vector_store %arg7[%c0_35, %c0_36, %c0_37], %51 {strides = array<i32>} : memref<2x16x128xf32, #tpu.memory_space<vmem>>, vector<2x16x128xf32>,
    } else {
    }
    return
  }
  func.func @transform_0(%arg0: i32, %arg1: i32) -> (i32, i32, i32) {
    %c0_i32 = arith.constant 0 : i32
    %0 = arith.cmpi eq, %arg0, %c0_i32 : i32
    %1 = arith.extui %0 : i1 to i32
    %2 = arith.muli %arg1, %1 : i32
    %c0_i32_0 = arith.constant 0 : i32
    %3 = arith.cmpi ne, %arg0, %c0_i32_0 : i32
    %4 = arith.extui %3 : i1 to i32
    %c0_i32_1 = arith.constant 0 : i32
    %5 = arith.muli %c0_i32_1, %4 : i32
    %6 = arith.addi %2, %5 : i32
    %c0_i32_2 = arith.constant 0 : i32
    %c0_i32_3 = arith.constant 0 : i32
    %c0_i32_4 = arith.constant 0 : i32
    return %c0_i32_2, %6, %c0_i32_3 : i32, i32, i32
  }
  func.func @transform_1(%arg0: i32, %arg1: i32) -> (i32, i32, i32) {
    %c1_i32 = arith.constant 1 : i32
    %0 = arith.cmpi sge, %arg0, %c1_i32 : i32
    %c3_i32 = arith.constant 3 : i32
    %1 = arith.cmpi sle, %arg0, %c3_i32 : i32
    %2 = arith.andi %0, %1 : i1
    %3 = arith.extui %2 : i1 to i32
    %4 = arith.muli %arg1, %3 : i32
    %c4_i32 = arith.constant 4 : i32
    %5 = arith.cmpi eq, %arg0, %c4_i32 : i32
    %6 = arith.extui %5 : i1 to i32
    %c0_i32 = arith.constant 0 : i32
    %7 = arith.muli %c0_i32, %6 : i32
    %8 = arith.addi %4, %7 : i32
    %c0_i32_0 = arith.constant 0 : i32
    %c0_i32_1 = arith.constant 0 : i32
    %c0_i32_2 = arith.constant 0 : i32
    return %c0_i32_0, %8, %c0_i32_1 : i32, i32, i32
  }
  func.func @transform_2(%arg0: i32, %arg1: i32) -> (i32, i32, i32) {
    %c1_i32 = arith.constant 1 : i32
    %0 = arith.subi %arg0, %c1_i32 : i32
    %c0_i32 = arith.constant 0 : i32
    %c2_i32 = arith.constant 2 : i32
    %1 = arith.maxsi %c0_i32, %0 : i32
    %2 = arith.minsi %c2_i32, %1 : i32
    %c0_i32_0 = arith.constant 0 : i32
    %c0_i32_1 = arith.constant 0 : i32
    %c0_i32_2 = arith.constant 0 : i32
    return %2, %c0_i32_0, %c0_i32_1 : i32, i32, i32
  }
  func.func @transform_3(%arg0: i32, %arg1: i32) -> (i32, i32, i32) {
    %c1_i32 = arith.constant 1 : i32
    %0 = arith.subi %arg0, %c1_i32 : i32
    %c0_i32 = arith.constant 0 : i32
    %c2_i32 = arith.constant 2 : i32
    %1 = arith.maxsi %c0_i32, %0 : i32
    %2 = arith.minsi %c2_i32, %1 : i32
    %c0_i32_0 = arith.constant 0 : i32
    %c0_i32_1 = arith.constant 0 : i32
    %c0_i32_2 = arith.constant 0 : i32
    return %2, %c0_i32_0, %c0_i32_1 : i32, i32, i32
  }
  func.func @transform_4(%arg0: i32, %arg1: i32) -> (i32, i32, i32) {
    %c0_i32 = arith.constant 0 : i32
    %c0_i32_0 = arith.constant 0 : i32
    %c0_i32_1 = arith.constant 0 : i32
    %c0_i32_2 = arith.constant 0 : i32
    return %c0_i32, %c0_i32_0, %c0_i32_1 : i32, i32, i32
  }
  func.func @transform_5(%arg0: i32, %arg1: i32) -> (i32, i32, i32) {
    %c4_i32 = arith.constant 4 : i32
    %0 = arith.cmpi eq, %arg0, %c4_i32 : i32
    %1 = arith.extui %0 : i1 to i32
    %2 = arith.muli %arg1, %1 : i32
    %c0_i32 = arith.constant 0 : i32
    %c0_i32_0 = arith.constant 0 : i32
    %c0_i32_1 = arith.constant 0 : i32
    return %c0_i32, %2, %c0_i32_0 : i32, i32, i32
  }
}

</mosaic_0001>

<llo_original>
// kernel: tpu_custom_call.1
$region0: #{tpu_custom_call.1}
  #allocation0 [shape = 'u32[]', space=smem, size = 0x4, offset = 0x4, fixed_abs, tag = 'smem constant byte address 0x4 - core index']
  #allocation1 [shape = 'u32[144,128]{1,0:T(1,128)}', space=vmem, size = 0x12000, scoped, tag = 'internal scratch']
  #allocation2 [shape = 'f32[3,2,16,128]{3,2,1,0:T(8,128)}', space=vmem, size = 0xc000, scoped, tag = 'scratch operand']
  #allocation3 [shape = 'f32[8,128]{1,0:T(8,128)}', space=vmem, size = 0x1000, scoped, tag = 'scratch operand']
  %s0 = inlined_call_operand.hbm [shape: f32[2,16,128], index: 0, kind: input, shape index: {}]
  %s1 = inlined_call_operand.hbm [shape: bf16[2,16,16], index: 1, kind: input, shape index: {}]
  %s2 = inlined_call_operand.hbm [shape: f32[3,256,128], index: 2, kind: input, shape index: {}]
  %s3 = inlined_call_operand.hbm [shape: f32[3,8,128], index: 3, kind: input, shape index: {}]
  %s4 = inlined_call_operand.hbm [shape: f32[3,128,128], index: 4, kind: input, shape index: {}]
  %s5 = inlined_call_operand.hbm [shape: f32[2,16,128], index: 5, kind: output, shape index: {}]
  %s6 = sld [smem:[#allocation0]]
  $region101: #{tpu_custom_call.1} parent=0
    _
  %s8 = ssub.s32 1, %s6
  %s9 = scalar_select 0, %s8, %s6
  $region1: #{tpu_custom_call.1} parent=0
    #allocation4 [shape = 'u8[32768]{0}', space=vmem, size = 0x8000, scoped, tag = 'input window, operand 0']
    #allocation5 [shape = 's32[2]{0}', space=sflag, size = 0x8, scoped, tag = 'scoped memory for tpu_custom_call.1']
    #allocation6 [shape = 's32[2]{0}', space=sflag, size = 0x8, scoped, tag = 'scoped memory for tpu_custom_call.1']
    #allocation7 [shape = 'u8[16384]{0}', space=vmem, size = 0x4000, scoped, tag = 'input window, operand 1']
    #allocation8 [shape = 's32[2]{0}', space=sflag, size = 0x8, scoped, tag = 'scoped memory for tpu_custom_call.1']
    #allocation9 [shape = 'u8[262144]{0}', space=vmem, size = 0x40000, scoped, tag = 'input window, operand 2']
    #allocation10 [shape = 'u8[8192]{0}', space=vmem, size = 0x2000, scoped, tag = 'input window, operand 3']
    #allocation11 [shape = 's32[2]{0}', space=sflag, size = 0x8, scoped, tag = 'scoped memory for tpu_custom_call.1']
    #allocation12 [shape = 'u8[196608]{0}', space=vmem, size = 0x30000, scoped, tag = 'input window, operand 4, single buffered']
    #allocation13 [shape = 'u8[32768]{0}', space=vmem, size = 0x8000, scoped, tag = 'output window, operand 0']
    %10 = vsyncpa [#allocation5], 0
    %s11 = scalar_lea.sflag [#allocation5], 1
    %12 = vsyncpa %s11, 0
    %13 = vsyncpa [#allocation8], 0
    %s14 = scalar_lea.sflag [#allocation8], 1
    %15 = vsyncpa %s14, 0
    %16 = vsyncpa [#allocation11], 0
    %s17 = scalar_lea.sflag [#allocation11], 1
    %18 = vsyncpa %s17, 0
    %19 = vsyncpa [#allocation6], 0
    %s20 = scalar_lea.sflag [#allocation6], 1
    %21 = vsyncpa %s20, 0
    loop: start=0, step=1, limit=7
    $region2: #{tpu_custom_call.1} parent=1 // loop_pre_header
      _
    $region3: #{tpu_custom_call.1} parent=1 // loop_header
      %s23 = sphi 0, %s27
      %p24 = scmp.ge.s32.totalorder %s23, 7
      %s30 = sphi 0, %s42
      %s31 = sphi 0, %s38
      %s32 = sphi 0, %s30
      %s33 = sphi 0, %s31
      %s34 = sphi 0, %s32
      %s35 = sphi 0, %s33
      %s51 = sphi 0, %s53
      %s54 = sphi 0, %s51
      %s55 = sphi 0, %s54
      %s71 = sphi 0, %s55
      %s89 = sphi 0, %s91
      %s92 = sphi 0, %s89
      %s93 = sphi 0, %s92
      %s109 = sphi 0, %s93
      %s125 = sphi 0, %s127
      %s128 = sphi 0, %s125
      %s129 = sphi 0, %s128
      %s145 = sphi 0, %s129
      %s161 = sphi 0, %s163
      %s164 = sphi 0, %s161
      %s165 = sphi 0, %s164
      %s181 = sphi 0, %s165
      %s185 = sphi 0, %s185
      %s187 = sphi 0, %s185
      %s188 = sphi 0, %s187
      %s202 = sphi 0, %s188
      %s214 = sphi 0, %s216
      %s217 = sphi 0, %s214
      %s218 = sphi 0, %s217
      %s234 = sphi 0, %s218
    $region4: #{tpu_custom_call.1} parent=1 // loop_header_branch
      %26 = sbr.rel (%p24) target = $region8
    $region5: #{tpu_custom_call.1} parent=1 // loop_body
      %s28 = ssub.s32 %s23, 1
      %s29 = ssub.s32 %s23, 2
      %s36 = sadd.s32 1, %s31
      %p37 = scmp.ge.s32.totalorder %s36, 1
      %s38 = scalar_select %p37, 0, %s36
      %s39 = sadd.s32 1, %s30
      %s40 = scalar_select %p37, %s39, %s30
      %p41 = scmp.ge.s32.totalorder %s40, 5
      %s42 = scalar_select %p41, 0, %s40
      %p43 = scmp.eq.s32.totalorder %s30, 0
      %s44 = scalar_select %p43, 1, 0
      %s45 = smul.u32 %s31, %s44
      %p46 = scmp.eq.s32.totalorder %s42, 0
      %s47 = scalar_select %p46, 1, 0
      %s48 = smul.u32 %s38, %s47
      %s49 = ssub.s32 %s45, %s48
      %p50 = scmp.eq.s32.totalorder %s49, 0
      %s52 = sadd.s32 %s51, 1
      %s53 = scalar_select %p50, %s51, %s52
      %p56 = pneg %p50
      %p57 = scmp.eq.s32.totalorder %s23, 4
      %p58 = por %p56, %p57
      %p59 = scmp.ne.s32.totalorder %s51, %s54
      %p60 = scmp.eq.s32.totalorder %s23, 0
      %p61 = por %p59, %p60
      %p62 = scmp.ne.s32.totalorder %s51, %s54
      %p63 = scmp.eq.s32.totalorder %s28, 4
      %p64 = por %p62, %p63
      %p65 = scmp.ne.s32.totalorder %s54, %s55
      %p66 = scmp.eq.s32.totalorder %s28, 0
      %p67 = por %p65, %p66
      %p68 = scmp.ne.s32.totalorder %s54, %s55
      %p69 = scmp.eq.s32.totalorder %s29, 4
      %p70 = por %p68, %p69
      %p72 = scmp.ne.s32.totalorder %s55, %s71
      %p73 = scmp.eq.s32.totalorder %s29, 0
      %p74 = por %p72, %p73
      %p75 = scmp.ge.s32.totalorder %s30, 1
      %p76 = scmp.le.s32.totalorder %s30, 3
      %p77 = pnand %p75, %p76
      %p78 = pneg %p77
      %s79 = scalar_select %p78, 1, 0
      %s80 = smul.u32 %s31, %s79
      %p81 = scmp.ge.s32.totalorder %s42, 1
      %p82 = scmp.le.s32.totalorder %s42, 3
      %p83 = pnand %p81, %p82
      %p84 = pneg %p83
      %s85 = scalar_select %p84, 1, 0
      %s86 = smul.u32 %s38, %s85
      %s87 = ssub.s32 %s80, %s86
      %p88 = scmp.eq.s32.totalorder %s87, 0
      %s90 = sadd.s32 %s89, 1
      %s91 = scalar_select %p88, %s89, %s90
      %p94 = pneg %p88
      %p95 = scmp.eq.s32.totalorder %s23, 4
      %p96 = por %p94, %p95
      %p97 = scmp.ne.s32.totalorder %s89, %s92
      %p98 = scmp.eq.s32.totalorder %s23, 0
      %p99 = por %p97, %p98
      %p100 = scmp.ne.s32.totalorder %s89, %s92
      %p101 = scmp.eq.s32.totalorder %s28, 4
      %p102 = por %p100, %p101
      %p103 = scmp.ne.s32.totalorder %s92, %s93
      %p104 = scmp.eq.s32.totalorder %s28, 0
      %p105 = por %p103, %p104
      %p106 = scmp.ne.s32.totalorder %s92, %s93
      %p107 = scmp.eq.s32.totalorder %s29, 4
      %p108 = por %p106, %p107
      %p110 = scmp.ne.s32.totalorder %s93, %s109
      %p111 = scmp.eq.s32.totalorder %s29, 0
      %p112 = por %p110, %p111
      %s113 = ssub.s32 %s30, 1
      %p114 = scmp.gt.s32.totalorder %s113, 0
      %s115 = scalar_select %p114, %s113, 0
      %p116 = scmp.lt.s32.totalorder %s115, 2
      %s117 = scalar_select %p116, %s115, 2
      %s118 = ssub.s32 %s42, 1
      %p119 = scmp.gt.s32.totalorder %s118, 0
      %s120 = scalar_select %p119, %s118, 0
      %p121 = scmp.lt.s32.totalorder %s120, 2
      %s122 = scalar_select %p121, %s120, 2
      %s123 = ssub.s32 %s117, %s122
      %p124 = scmp.eq.s32.totalorder %s123, 0
      %s126 = sadd.s32 %s125, 1
      %s127 = scalar_select %p124, %s125, %s126
      %p130 = pneg %p124
      %p131 = scmp.eq.s32.totalorder %s23, 4
      %p132 = por %p130, %p131
      %p133 = scmp.ne.s32.totalorder %s125, %s128
      %p134 = scmp.eq.s32.totalorder %s23, 0
      %p135 = por %p133, %p134
      %p136 = scmp.ne.s32.totalorder %s125, %s128
      %p137 = scmp.eq.s32.totalorder %s28, 4
      %p138 = por %p136, %p137
      %p139 = scmp.ne.s32.totalorder %s128, %s129
      %p140 = scmp.eq.s32.totalorder %s28, 0
      %p141 = por %p139, %p140
      %p142 = scmp.ne.s32.totalorder %s128, %s129
      %p143 = scmp.eq.s32.totalorder %s29, 4
      %p144 = por %p142, %p143
      %p146 = scmp.ne.s32.totalorder %s129, %s145
      %p147 = scmp.eq.s32.totalorder %s29, 0
      %p148 = por %p146, %p147
      %s149 = ssub.s32 %s30, 1
      %p150 = scmp.gt.s32.totalorder %s149, 0
      %s151 = scalar_select %p150, %s149, 0
      %p152 = scmp.lt.s32.totalorder %s151, 2
      %s153 = scalar_select %p152, %s151, 2
      %s154 = ssub.s32 %s42, 1
      %p155 = scmp.gt.s32.totalorder %s154, 0
      %s156 = scalar_select %p155, %s154, 0
      %p157 = scmp.lt.s32.totalorder %s156, 2
      %s158 = scalar_select %p157, %s156, 2
      %s159 = ssub.s32 %s153, %s158
      %p160 = scmp.eq.s32.totalorder %s159, 0
      %s162 = sadd.s32 %s161, 1
      %s163 = scalar_select %p160, %s161, %s162
      %p166 = pneg %p160
      %p167 = scmp.eq.s32.totalorder %s23, 4
      %p168 = por %p166, %p167
      %p169 = scmp.ne.s32.totalorder %s161, %s164
      %p170 = scmp.eq.s32.totalorder %s23, 0
      %p171 = por %p169, %p170
      %p172 = scmp.ne.s32.totalorder %s161, %s164
      %p173 = scmp.eq.s32.totalorder %s28, 4
      %p174 = por %p172, %p173
      %p175 = scmp.ne.s32.totalorder %s164, %s165
      %p176 = scmp.eq.s32.totalorder %s28, 0
      %p177 = por %p175, %p176
      %p178 = scmp.ne.s32.totalorder %s164, %s165
      %p179 = scmp.eq.s32.totalorder %s29, 4
      %p180 = por %p178, %p179
      %p182 = scmp.ne.s32.totalorder %s165, %s181
      %p183 = scmp.eq.s32.totalorder %s29, 0
      %p184 = por %p182, %p183
      %s186 = sadd.s32 %s185, 1
      %p189 = scmp.eq.s32.totalorder %s23, 4
      %p190 = scmp.ne.s32.totalorder %s185, %s187
      %p191 = scmp.eq.s32.totalorder %s23, 0
      %p192 = por %p190, %p191
      %p193 = scmp.ne.s32.totalorder %s185, %s187
      %p194 = scmp.eq.s32.totalorder %s28, 4
      %p195 = por %p193, %p194
      %p196 = scmp.ne.s32.totalorder %s187, %s188
      %p197 = scmp.eq.s32.totalorder %s28, 0
      %p198 = por %p196, %p197
      %p199 = scmp.ne.s32.totalorder %s187, %s188
      %p200 = scmp.eq.s32.totalorder %s29, 4
      %p201 = por %p199, %p200
      %p203 = scmp.ne.s32.totalorder %s188, %s202
      %p204 = scmp.eq.s32.totalorder %s29, 0
      %p205 = por %p203, %p204
      %p206 = scmp.eq.s32.totalorder %s30, 4
      %s207 = scalar_select %p206, 1, 0
      %s208 = smul.u32 %s31, %s207
      %p209 = scmp.eq.s32.totalorder %s42, 4
      %s210 = scalar_select %p209, 1, 0
      %s211 = smul.u32 %s38, %s210
      %s212 = ssub.s32 %s208, %s211
      %p213 = scmp.eq.s32.totalorder %s212, 0
      %s215 = sadd.s32 %s214, 1
      %s216 = scalar_select %p213, %s214, %s215
      %p219 = pneg %p213
      %p220 = scmp.eq.s32.totalorder %s23, 4
      %p221 = por %p219, %p220
      %p222 = scmp.ne.s32.totalorder %s214, %s217
      %p223 = scmp.eq.s32.totalorder %s23, 0
      %p224 = por %p222, %p223
      %p225 = scmp.ne.s32.totalorder %s214, %s217
      %p226 = scmp.eq.s32.totalorder %s28, 4
      %p227 = por %p225, %p226
      %p228 = scmp.ne.s32.totalorder %s217, %s218
      %p229 = scmp.eq.s32.totalorder %s28, 0
      %p230 = por %p228, %p229
      %p231 = scmp.ne.s32.totalorder %s217, %s218
      %p232 = scmp.eq.s32.totalorder %s29, 4
      %p233 = por %p231, %p232
      %p235 = scmp.ne.s32.totalorder %s218, %s234
      %p236 = scmp.eq.s32.totalorder %s29, 0
      %p237 = por %p235, %p236
      %p238 = scmp.le.s32.totalorder 1, %s23
      %p239 = scmp.lt.s32.totalorder %s23, 6
      %p240 = pnand %p238, %p239
      %p241 = pneg %p240
      // Predicated region
      $region9: #{tpu_custom_call.1} parent=5 // pred_check
        _
      $region10: #{tpu_custom_call.1} parent=5 // pred_check_branch
        %243 = sbr.rel (%p240) target = $region12
      $region11: #{tpu_custom_call.1} parent=5 // pred_region
        %s244 = ssub.s32 %s23, 1
        // Predicated region
        $region13: #{tpu_custom_call.1} parent=11 // pred_check
          %p245 = pneg %p198
        $region14: #{tpu_custom_call.1} parent=11 // pred_check_branch
          %247 = sbr.rel (%p245) target = $region16
        $region15: #{tpu_custom_call.1} parent=11 // pred_region
          %s249 = ssub.s32 6144, 6144
          %250 = vsyncadd [#allocation11], %s249
          %s251 = sshll.u32 [#allocation12], 4
          %s252 = int_to_ptr.vmem [resolvable:$true] %s251
          %257 = dma.hbm_to_vmem [thread:$0]  %s4, 6144, %s252, [#allocation11], 128, 128, 8
        $region16: #{tpu_custom_call.1} parent=11 // pred_fallthru
          _
      $region12: #{tpu_custom_call.1} parent=5 // pred_fallthru
        _
      %p258 = scmp.lt.s32.totalorder %s23, 5
      // Predicated region
      $region17: #{tpu_custom_call.1} parent=5 // pred_check
        %p259 = pneg %p258
      $region18: #{tpu_custom_call.1} parent=5 // pred_check_branch
        %261 = sbr.rel (%p259) target = $region20
      $region19: #{tpu_custom_call.1} parent=5 // pred_region
        // Predicated region
        $region21: #{tpu_custom_call.1} parent=19 // pred_check
          %p262 = pneg %p61
        $region22: #{tpu_custom_call.1} parent=19 // pred_check_branch
          %264 = sbr.rel (%p262) target = $region24
        $region23: #{tpu_custom_call.1} parent=19 // pred_region
          %s265 = sand.u32 %s51, 1
          %s266 = scalar_lea.sflag [#allocation5], %s265
          %s267 = sand.u32 %s51, 1
          %s268 = smul.addr %s267, 32
          %s269 = scalar_lea.vmem [#allocation4], %s268
          %p270 = scmp.eq.s32.totalorder %s30, 0
          %s271 = scalar_select %p270, 1, 0
          %s272 = smul.u32 %s31, %s271
          %s273 = smul.u32 2, %s272
          %s275 = ssub.s32 512, 512
          %276 = vsyncadd %s266, %s275
          %s277 = smul.addr %s273, 128
          %s278 = scalar_lea.hbm %s0, %s277
          %s279 = sshll.u32 %s269, 4
          %s280 = int_to_ptr.vmem [resolvable:$true] %s279
          %285 = dma.hbm_to_vmem [thread:$0]  %s278, 512, %s280, %s266, 128, 128, 8
        $region24: #{tpu_custom_call.1} parent=19 // pred_fallthru
          _
        // Predicated region
        $region25: #{tpu_custom_call.1} parent=19 // pred_check
          %p286 = pneg %p99
        $region26: #{tpu_custom_call.1} parent=19 // pred_check_branch
          %288 = sbr.rel (%p286) target = $region28
        $region27: #{tpu_custom_call.1} parent=19 // pred_region
          %s289 = sand.u32 %s23, 1
          %s290 = scalar_lea.sflag [#allocation8], %s289
          %s291 = sand.u32 %s89, 1
          %s292 = smul.addr %s291, 16
          %s293 = scalar_lea.vmem [#allocation7], %s292
          %p294 = scmp.ge.s32.totalorder %s30, 1
          %p295 = scmp.le.s32.totalorder %s30, 3
          %p296 = pnand %p294, %p295
          %p297 = pneg %p296
          %s298 = scalar_select %p297, 1, 0
          %s299 = smul.u32 %s31, %s298
          %s300 = smul.u32 2, %s299
          %s302 = ssub.s32 256, 256
          %303 = vsyncadd %s290, %s302
          %s304 = smul.addr %s300, 64
          %s305 = scalar_lea.hbm %s1, %s304
          %s306 = sshll.u32 %s293, 4
          %s307 = int_to_ptr.vmem [resolvable:$true] %s306
          %312 = dma.hbm_to_vmem [thread:$0]  %s305, 256, %s307, %s290, 64, 64, 4
        $region28: #{tpu_custom_call.1} parent=19 // pred_fallthru
          _
        // Predicated region
        $region29: #{tpu_custom_call.1} parent=19 // pred_check
          %p313 = pneg %p135
        $region30: #{tpu_custom_call.1} parent=19 // pred_check_branch
          %315 = sbr.rel (%p313) target = $region32
        $region31: #{tpu_custom_call.1} parent=19 // pred_region
          %s316 = sand.u32 %s23, 1
          %s317 = scalar_lea.sflag [#allocation8], %s316
          %s318 = sand.u32 %s125, 1
          %s319 = smul.addr %s318, 256
          %s320 = scalar_lea.vmem [#allocation9], %s319
          %s321 = ssub.s32 %s30, 1
          %p322 = scmp.gt.s32.totalorder %s321, 0
          %s323 = scalar_select %p322, %s321, 0
          %p324 = scmp.lt.s32.totalorder %s323, 2
          %s325 = scalar_select %p324, %s323, 2
          %s327 = ssub.s32 4096, 4096
          %328 = vsyncadd %s317, %s327
          %s329 = smul.addr %s325, 32
          %s330 = smul.addr %s329, 128
          %s331 = scalar_lea.hbm %s2, %s330
          %s332 = sshll.u32 %s320, 4
          %s333 = int_to_ptr.vmem [resolvable:$true] %s332
          %338 = dma.hbm_to_vmem [thread:$0]  %s331, 4096, %s333, %s317, 128, 128, 8
        $region32: #{tpu_custom_call.1} parent=19 // pred_fallthru
          _
        // Predicated region
        $region33: #{tpu_custom_call.1} parent=19 // pred_check
          %p339 = pneg %p171
        $region34: #{tpu_custom_call.1} parent=19 // pred_check_branch
          %341 = sbr.rel (%p339) target = $region36
        $region35: #{tpu_custom_call.1} parent=19 // pred_region
          %s342 = sand.u32 %s23, 1
          %s343 = scalar_lea.sflag [#allocation11], %s342
          %s344 = sand.u32 %s161, 1
          %s345 = smul.addr %s344, 8
          %s346 = scalar_lea.vmem [#allocation10], %s345
          %s347 = ssub.s32 %s30, 1
          %p348 = scmp.gt.s32.totalorder %s347, 0
          %s349 = scalar_select %p348, %s347, 0
          %p350 = scmp.lt.s32.totalorder %s349, 2
          %s351 = scalar_select %p350, %s349, 2
          %s353 = ssub.s32 128, 128
          %354 = vsyncadd %s343, %s353
          %s355 = smul.addr %s351, 128
          %s356 = scalar_lea.hbm %s3, %s355
          %s358 = sshll.u32 %s346, 4
          %s359 = int_to_ptr.vmem [resolvable:$true] %s358
          %361 = dma.hbm_to_vmem [thread:$0]  %s356, 128, %s359, %s343
        $region36: #{tpu_custom_call.1} parent=19 // pred_fallthru
          _
      $region20: #{tpu_custom_call.1} parent=5 // pred_fallthru
        _
      %p362 = scmp.le.s32.totalorder 1, %s23
      %p363 = scmp.lt.s32.totalorder %s23, 6
      %p364 = pnand %p362, %p363
      %p365 = pneg %p364
      // Predicated region
      $region37: #{tpu_custom_call.1} parent=5 // pred_check
        _
      $region38: #{tpu_custom_call.1} parent=5 // pred_check_branch
        %367 = sbr.rel (%p364) target = $region40
      $region39: #{tpu_custom_call.1} parent=5 // pred_region
        %s368 = ssub.s32 %s23, 1
        %s369 = sand.u32 %s54, 1
        %s370 = scalar_lea.sflag [#allocation5], %s369
        %s371 = sand.u32 %s54, 1
        %s372 = smul.addr %s371, 32
        %s373 = scalar_lea.vmem [#allocation4], %s372
        // Predicated region
        $region41: #{tpu_custom_call.1} parent=39 // pred_check
          %p374 = pneg %p67
        $region42: #{tpu_custom_call.1} parent=39 // pred_check_branch
          %376 = sbr.rel (%p374) target = $region44
        $region43: #{tpu_custom_call.1} parent=39 // pred_region
          %377 = dma.done %s370, 512
        $region44: #{tpu_custom_call.1} parent=39 // pred_fallthru
          _
        %s378 = sand.u32 %s28, 1
        %s379 = scalar_lea.sflag [#allocation8], %s378
        %s380 = sand.u32 %s92, 1
        %s381 = smul.addr %s380, 16
        %s382 = scalar_lea.vmem [#allocation7], %s381
        // Predicated region
        $region45: #{tpu_custom_call.1} parent=39 // pred_check
          %p383 = pneg %p105
        $region46: #{tpu_custom_call.1} parent=39 // pred_check_branch
          %385 = sbr.rel (%p383) target = $region48
        $region47: #{tpu_custom_call.1} parent=39 // pred_region
          %386 = dma.done %s379, 256
        $region48: #{tpu_custom_call.1} parent=39 // pred_fallthru
          _
        %s387 = sand.u32 %s28, 1
        %s388 = scalar_lea.sflag [#allocation8], %s387
        %s389 = sand.u32 %s128, 1
        %s390 = smul.addr %s389, 256
        %s391 = scalar_lea.vmem [#allocation9], %s390
        // Predicated region
        $region49: #{tpu_custom_call.1} parent=39 // pred_check
          %p392 = pneg %p141
        $region50: #{tpu_custom_call.1} parent=39 // pred_check_branch
          %394 = sbr.rel (%p392) target = $region52
        $region51: #{tpu_custom_call.1} parent=39 // pred_region
          %395 = dma.done %s388, 4096
        $region52: #{tpu_custom_call.1} parent=39 // pred_fallthru
          _
        %s396 = sand.u32 %s28, 1
        %s397 = scalar_lea.sflag [#allocation11], %s396
        %s398 = sand.u32 %s164, 1
        %s399 = smul.addr %s398, 8
        %s400 = scalar_lea.vmem [#allocation10], %s399
        // Predicated region
        $region53: #{tpu_custom_call.1} parent=39 // pred_check
          %p401 = pneg %p177
        $region54: #{tpu_custom_call.1} parent=39 // pred_check_branch
          %403 = sbr.rel (%p401) target = $region56
        $region55: #{tpu_custom_call.1} parent=39 // pred_region
          %404 = dma.done %s397, 128
        $region56: #{tpu_custom_call.1} parent=39 // pred_fallthru
          _
        // Predicated region
        $region57: #{tpu_custom_call.1} parent=39 // pred_check
          %p405 = pneg %p198
        $region58: #{tpu_custom_call.1} parent=39 // pred_check_branch
          %407 = sbr.rel (%p405) target = $region60
        $region59: #{tpu_custom_call.1} parent=39 // pred_region
          %408 = dma.done [#allocation11], 6144
        $region60: #{tpu_custom_call.1} parent=39 // pred_fallthru
          _
        %s409 = sand.u32 %s54, 1
        %s410 = scalar_lea.sflag [#allocation5], %s409
        %s411 = sand.u32 %s54, 1
        %s412 = smul.addr %s411, 32
        %s413 = scalar_lea.vmem [#allocation4], %s412
        %p414 = pneg %p67
        %p415 = pneg %p64
        %s416 = sand.u32 %s28, 1
        %s417 = scalar_lea.sflag [#allocation8], %s416
        %s418 = sand.u32 %s92, 1
        %s419 = smul.addr %s418, 16
        %s420 = scalar_lea.vmem [#allocation7], %s419
        %p421 = pneg %p105
        %p422 = pneg %p102
        %s423 = sand.u32 %s28, 1
        %s424 = scalar_lea.sflag [#allocation8], %s423
        %s425 = sand.u32 %s128, 1
        %s426 = smul.addr %s425, 256
        %s427 = scalar_lea.vmem [#allocation9], %s426
        %p428 = pneg %p141
        %p429 = pneg %p138
        %s430 = sand.u32 %s28, 1
        %s431 = scalar_lea.sflag [#allocation11], %s430
        %s432 = sand.u32 %s164, 1
        %s433 = smul.addr %s432, 8
        %s434 = scalar_lea.vmem [#allocation10], %s433
        %p435 = pneg %p177
        %p436 = pneg %p174
        %p437 = pneg %p198
        %p438 = pneg %p195
        %p439 = pneg %p230
        %p440 = pneg %p227
        %s441 = sand.u32 %s217, 1
        %s442 = scalar_lea.sflag [#allocation6], %s441
        %s443 = sand.u32 %s217, 1
        %s444 = smul.addr %s443, 32
        %s445 = scalar_lea.vmem [#allocation13], %s444
        %p446 = scmp.eq.s32.totalorder %s32, 0
        %s447 = scalar_select %p446, 1, 0
        %s448 = smul.u32 %s33, %s447
        %s449 = smul.u32 2, %s448
        %p450 = scmp.ge.s32.totalorder %s32, 1
        %p451 = scmp.le.s32.totalorder %s32, 3
        %p452 = pnand %p450, %p451
        %p453 = pneg %p452
        %s454 = scalar_select %p453, 1, 0
        %s455 = smul.u32 %s33, %s454
        %s456 = smul.u32 2, %s455
        %s457 = ssub.s32 %s32, 1
        %p458 = scmp.gt.s32.totalorder %s457, 0
        %s459 = scalar_select %p458, %s457, 0
        %p460 = scmp.lt.s32.totalorder %s459, 2
        %s461 = scalar_select %p460, %s459, 2
        %s462 = ssub.s32 %s32, 1
        %p463 = scmp.gt.s32.totalorder %s462, 0
        %s464 = scalar_select %p463, %s462, 0
        %p465 = scmp.lt.s32.totalorder %s464, 2
        %s466 = scalar_select %p465, %s464, 2
        %p467 = scmp.eq.s32.totalorder %s32, 4
        %s468 = scalar_select %p467, 1, 0
        %s469 = smul.u32 %s33, %s468
        %s470 = smul.u32 2, %s469
        %s471 = smul.u32 %s33, 16
        %p472 = scmp.eq.s32.totalorder %s32, 0
        // Predicated region
        $region61: #{tpu_custom_call.1} parent=39 // pred_check
          %p473 = pneg %p472
        $region62: #{tpu_custom_call.1} parent=39 // pred_check_branch
          %475 = sbr.rel (%p473) target = $region64
        $region63: #{tpu_custom_call.1} parent=39 // pred_region
          %v476 = vld [vmem:[%s373] sm:$0xff]
          %v477 = vld [vmem:[%s373 + $0x8] sm:$0xff]
          %v478 = vld [vmem:[%s373 + $0x10] sm:$0xff]
          %v479 = vld [vmem:[%s373 + $0x18] sm:$0xff]
          %s480 = scalar_lea.vmem [#allocation2], 64
          %s481 = scalar_lea.vmem %s480, %s471 [#allocation2]
          %482 = vst [vmem:[%s481] sm:$0xff] %v476
          %483 = vst [vmem:[%s481 + $0x8] sm:$0xff] %v477
          %484 = vst [vmem:[%s481 + $0x10] sm:$0xff] %v478
          %485 = vst [vmem:[%s481 + $0x18] sm:$0xff] %v479
        $region64: #{tpu_custom_call.1} parent=39 // pred_fallthru
          _
        %p486 = scmp.ge.s32.totalorder %s32, 1
        %p487 = scmp.le.s32.totalorder %s32, 3
        %p488 = pnand %p486, %p487
        %p489 = pneg %p488
        // Predicated region
        $region65: #{tpu_custom_call.1} parent=39 // pred_check
          _
        $region66: #{tpu_custom_call.1} parent=39 // pred_check_branch
          %491 = sbr.rel (%p488) target = $region68
        $region67: #{tpu_custom_call.1} parent=39 // pred_region
          %s492 = sadd.s32 %s32, 1
          %p493 = scmp.lt.s32.totalorder %s492, 0
          %s494 = ssub.s32 0, %s492
          %s495 = scalar_select %p493, %s494, %s492
          %s496 = sdiv.u32.pop %s495, 3
          %s497 = srem.u32.pop %s495, 3
          %s498 = ssub.s32 0, %s497
          %s499 = scalar_select %p493, %s498, %s497
          %p500 = scmp.ne.s32.totalorder %s499, 0
          %p501 = scmp.lt.s32.totalorder %s499, 0
          %p502 = pnand %p501, %p500
          %p503 = pneg %p502
          %s504 = sadd.s32 %s499, 3
          %s505 = scalar_select %p503, %s504, %s499
          %s506 = ssub.s32 %s32, 1
          %p507 = scmp.eq.s32.totalorder %s33, 0
          // Predicated region
          $region69: #{tpu_custom_call.1} parent=67 // pred_check
            %p508 = pneg %p507
          $region70: #{tpu_custom_call.1} parent=67 // pred_check_branch
            %510 = sbr.rel (%p508) target = $region72
          $region71: #{tpu_custom_call.1} parent=67 // pred_region
            %511 = vst [vmem:[#allocation3] sm:$0x3] 0.0
          $region72: #{tpu_custom_call.1} parent=67 // pred_fallthru
            _
          %v512 = vld [vmem:[%s382] sm:$0xf]
          %v513 = vld [vmem:[%s382 + $0x4] sm:$0xf]
          %v514 = vld [vmem:[%s382 + $0x8] sm:$0xf]
          %v515 = vld [vmem:[%s382 + $0xc] sm:$0xf]
          %v516 = vunpack.c.l.bf16 %v512
          %v517 = vunpack.c.l.bf16 %v513
          %v518 = vunpack.c.l.bf16 %v514
          %v519 = vunpack.c.l.bf16 %v515
          %vm520 = vcmask 130048
          %v521 = vsel %vm520, %v516, 0.0
          %522 = vadd.xlane.f32.xlu0 %v521
          %v523 = vpop.xlane.xlu0 %522
          %v524 = vsel %vm520, %v517, 0.0
          %525 = vadd.xlane.f32.xlu0 %v524
          %v526 = vpop.xlane.xlu0 %525
          %v527 = vsel %vm520, %v518, 0.0
          %528 = vadd.xlane.f32.xlu0 %v527
          %v529 = vpop.xlane.xlu0 %528
          %v530 = vsel %vm520, %v519, 0.0
          %531 = vadd.xlane.f32.xlu0 %v530
          %v532 = vpop.xlane.xlu0 %531
          %v533 = vmax.f32 %v523, 1.0
          %v534 = vmax.f32 %v526, 1.0
          %v535 = vmax.f32 %v529, 1.0
          %v536 = vmax.f32 %v532, 1.0
          %v537 = vrcp.pop %v533
          %v538 = vmul.f32 1.0, %v537
          %v539 = vrcp.pop %v534
          %v540 = vmul.f32 1.0, %v539
          %v541 = vrcp.pop %v535
          %v542 = vmul.f32 1.0, %v541
          %v543 = vrcp.pop %v536
          %v544 = vmul.f32 1.0, %v543
          %s545 = smul.u32 %s505, 32
          %s546 = scalar_lea.vmem [#allocation2], %s545
          %v547 = vld [vmem:[%s546] sm:$0xff]
          %v548 = vld [vmem:[%s546 + $0x8] sm:$0xff]
          %v549 = vld [vmem:[%s546 + $0x10] sm:$0xff]
          %v550 = vld [vmem:[%s546 + $0x18] sm:$0xff]
          %v552 = vsel %vm520, %v516, 0
          %v555 = vsel %vm520, %v517, 0
          %557 = vmatprep.subr.mxu0 0.0
          %558 = vmatpush1.msra.mxu0 %v547
          %559 = vmatprep.subr.mxu0 0.0
          %560 = vmatpush1.msra.mxu0 %v548
          %561 = vmatprep.subr.mxu0 0.0
          %562 = vmatpush1.msra.mxu0 0.0
          %563 = vmatprep.subr.mxu0 0.0
          %564 = vmatpush1.msra.mxu0 0.0
          %565 = vmatprep.subr.mxu0 0.0
          %566 = vmatpush1.msra.mxu0 0.0
          %567 = vmatprep.subr.mxu0 0.0
          %568 = vmatpush1.msra.mxu0 0.0
          %569 = vmatprep.subr.mxu0 0.0
          %570 = vmatpush1.msra.mxu0 0.0
          %571 = vmatprep.subr.mxu0 0.0
          %572 = vmatpush1.msra.mxu0 0.0
          %573 = vmatprep.subr.mxu0 0.0
          %574 = vmatpush1.msra.mxu0 0.0
          %575 = vmatprep.subr.mxu0 0.0
          %576 = vmatpush1.msra.mxu0 0.0
          %577 = vmatprep.subr.mxu0 0.0
          %578 = vmatpush1.msra.mxu0 0.0
          %579 = vmatprep.subr.mxu0 0.0
          %580 = vmatpush1.msra.mxu0 0.0
          %581 = vmatprep.subr.mxu0 0.0
          %582 = vmatpush1.msra.mxu0 0.0
          %583 = vmatprep.subr.mxu0 0.0
          %584 = vmatpush1.msra.mxu0 0.0
          %585 = vmatprep.subr.mxu0 0.0
          %586 = vmatpush1.msra.mxu0 0.0
          %587 = vmatprep.subr.mxu0 0.0
          %588 = vmatpush1.msra.mxu0 0.0
          %589 = vmatprep.subr.mxu0 0.0
          %590 = vmatpush1.msra.mxu0 0.0
          %591 = vmatprep.subr.mxu0 0.0
          %592 = vmatpush1.msra.mxu0 0.0
          %593 = vmatprep.subr.mxu0 0.0
          %594 = vmatpush1.msra.mxu0 0.0
          %595 = vmatprep.subr.mxu0 0.0
          %596 = vmatpush1.msra.mxu0 0.0
          %597 = vmatprep.subr.mxu0 0.0
          %598 = vmatpush1.msra.mxu0 0.0
          %599 = vmatprep.subr.mxu0 0.0
          %600 = vmatpush1.msra.mxu0 0.0
          %601 = vmatprep.subr.mxu0 0.0
          %602 = vmatpush1.msra.mxu0 0.0
          %603 = vmatprep.subr.mxu0 0.0
          %604 = vmatpush1.msra.mxu0 0.0
          %605 = vmatprep.subr.mxu0 0.0
          %606 = vmatpush1.msra.mxu0 0.0
          %607 = vmatprep.subr.mxu0 0.0
          %608 = vmatpush1.msra.mxu0 0.0
          %609 = vmatprep.subr.mxu0 0.0
          %610 = vmatpush1.msra.mxu0 0.0
          %611 = vmatprep.subr.mxu0 0.0
          %612 = vmatpush1.msra.mxu0 0.0
          %613 = vmatprep.subr.mxu0 0.0
          %614 = vmatpush1.msra.mxu0 0.0
          %615 = vmatprep.subr.mxu0 0.0
          %616 = vmatpush1.msra.mxu0 0.0
          %617 = vmatprep.subr.mxu0 0.0
          %618 = vmatpush1.msra.mxu0 0.0
          %619 = vmatprep.subr.mxu0 0.0
          %620 = vmatpush1.msra.mxu0 0.0
          %621 = vmatprep.mubr.f32.mxu0 0.0
          %622 = vmatmul.mubr.f32.gmra.mrb[0].mxu0 %v552
          %v623 = vpop.f32.mrb[0].mxu0
          %v624 = vadd.f32 0.0, %v623
          %v625 = vpop.f32.mrb[0].mxu0
          %626 = vmatprep.mubr.f32.mxu0 0.0
          %627 = vmatmul.mubr.f32.gmra.mrb[0].mxu0 %v555
          %v628 = vpop.f32.mrb[0].mxu0
          %v629 = vadd.f32 0.0, %v628
          %v630 = vpop.f32.mrb[0].mxu0
          %631 = vdwg.mxu0
          %v633 = vsel %vm520, %v518, 0
          %v636 = vsel %vm520, %v519, 0
          %638 = vmatprep.subr.mxu0 0.0
          %639 = vmatpush1.msra.mxu0 %v549
          %640 = vmatprep.subr.mxu0 0.0
          %641 = vmatpush1.msra.mxu0 %v550
          %642 = vmatprep.subr.mxu0 0.0
          %643 = vmatpush1.msra.mxu0 0.0
          %644 = vmatprep.subr.mxu0 0.0
          %645 = vmatpush1.msra.mxu0 0.0
          %646 = vmatprep.subr.mxu0 0.0
          %647 = vmatpush1.msra.mxu0 0.0
          %648 = vmatprep.subr.mxu0 0.0
          %649 = vmatpush1.msra.mxu0 0.0
          %650 = vmatprep.subr.mxu0 0.0
          %651 = vmatpush1.msra.mxu0 0.0
          %652 = vmatprep.subr.mxu0 0.0
          %653 = vmatpush1.msra.mxu0 0.0
          %654 = vmatprep.subr.mxu0 0.0
          %655 = vmatpush1.msra.mxu0 0.0
          %656 = vmatprep.subr.mxu0 0.0
          %657 = vmatpush1.msra.mxu0 0.0
          %658 = vmatprep.subr.mxu0 0.0
          %659 = vmatpush1.msra.mxu0 0.0
          %660 = vmatprep.subr.mxu0 0.0
          %661 = vmatpush1.msra.mxu0 0.0
          %662 = vmatprep.subr.mxu0 0.0
          %663 = vmatpush1.msra.mxu0 0.0
          %664 = vmatprep.subr.mxu0 0.0
          %665 = vmatpush1.msra.mxu0 0.0
          %666 = vmatprep.subr.mxu0 0.0
          %667 = vmatpush1.msra.mxu0 0.0
          %668 = vmatprep.subr.mxu0 0.0
          %669 = vmatpush1.msra.mxu0 0.0
          %670 = vmatprep.subr.mxu0 0.0
          %671 = vmatpush1.msra.mxu0 0.0
          %672 = vmatprep.subr.mxu0 0.0
          %673 = vmatpush1.msra.mxu0 0.0
          %674 = vmatprep.subr.mxu0 0.0
          %675 = vmatpush1.msra.mxu0 0.0
          %676 = vmatprep.subr.mxu0 0.0
          %677 = vmatpush1.msra.mxu0 0.0
          %678 = vmatprep.subr.mxu0 0.0
          %679 = vmatpush1.msra.mxu0 0.0
          %680 = vmatprep.subr.mxu0 0.0
          %681 = vmatpush1.msra.mxu0 0.0
          %682 = vmatprep.subr.mxu0 0.0
          %683 = vmatpush1.msra.mxu0 0.0
          %684 = vmatprep.subr.mxu0 0.0
          %685 = vmatpush1.msra.mxu0 0.0
          %686 = vmatprep.subr.mxu0 0.0
          %687 = vmatpush1.msra.mxu0 0.0
          %688 = vmatprep.subr.mxu0 0.0
          %689 = vmatpush1.msra.mxu0 0.0
          %690 = vmatprep.subr.mxu0 0.0
          %691 = vmatpush1.msra.mxu0 0.0
          %692 = vmatprep.subr.mxu0 0.0
          %693 = vmatpush1.msra.mxu0 0.0
          %694 = vmatprep.subr.mxu0 0.0
          %695 = vmatpush1.msra.mxu0 0.0
          %696 = vmatprep.subr.mxu0 0.0
          %697 = vmatpush1.msra.mxu0 0.0
          %698 = vmatprep.subr.mxu0 0.0
          %699 = vmatpush1.msra.mxu0 0.0
          %700 = vmatprep.subr.mxu0 0.0
          %701 = vmatpush1.msra.mxu0 0.0
          %702 = vmatprep.mubr.f32.mxu0 0.0
          %703 = vmatmul.mubr.f32.gmra.mrb[0].mxu0 %v633
          %v704 = vpop.f32.mrb[0].mxu0
          %v705 = vadd.f32 0.0, %v704
          %v706 = vpop.f32.mrb[0].mxu0
          %707 = vmatprep.mubr.f32.mxu0 0.0
          %708 = vmatmul.mubr.f32.gmra.mrb[0].mxu0 %v636
          %v709 = vpop.f32.mrb[0].mxu0
          %v710 = vadd.f32 0.0, %v709
          %v711 = vpop.f32.mrb[0].mxu0
          %712 = vdwg.mxu0
          %v713 = vmul.f32 %v624, %v538
          %v714 = vmul.f32 %v629, %v540
          %v715 = vmul.f32 %v705, %v542
          %v716 = vmul.f32 %v710, %v544
          %s717 = scalar_lea.vmem %s546, %s471 [#allocation2]
          %v718 = vld [vmem:[%s717] sm:$0xff]
          %v719 = vld [vmem:[%s717 + $0x8] sm:$0xff]
          %v720 = vld [vmem:[%s717 + $0x10] sm:$0xff]
          %v721 = vld [vmem:[%s717 + $0x18] sm:$0xff]
          %v722 = vld [vmem:[%s391] sm:$0xff]
          %v723 = vld [vmem:[%s391 + $0x8] sm:$0xff]
          %v724 = vld [vmem:[%s391 + $0x10] sm:$0xff]
          %v725 = vld [vmem:[%s391 + $0x18] sm:$0xff]
          %v726 = vld [vmem:[%s391 + $0x20] sm:$0xff]
          %v727 = vld [vmem:[%s391 + $0x28] sm:$0xff]
          %v728 = vld [vmem:[%s391 + $0x30] sm:$0xff]
          %v729 = vld [vmem:[%s391 + $0x38] sm:$0xff]
          %v730 = vld [vmem:[%s391 + $0x40] sm:$0xff]
          %v731 = vld [vmem:[%s391 + $0x48] sm:$0xff]
          %v732 = vld [vmem:[%s391 + $0x50] sm:$0xff]
          %v733 = vld [vmem:[%s391 + $0x58] sm:$0xff]
          %v734 = vld [vmem:[%s391 + $0x60] sm:$0xff]
          %v735 = vld [vmem:[%s391 + $0x68] sm:$0xff]
          %v736 = vld [vmem:[%s391 + $0x70] sm:$0xff]
          %v737 = vld [vmem:[%s391 + $0x78] sm:$0xff]
          %v738 = vld [vmem:[%s391 + $0x80] sm:$0xff]
          %v739 = vld [vmem:[%s391 + $0x88] sm:$0xff]
          %v740 = vld [vmem:[%s391 + $0x90] sm:$0xff]
          %v741 = vld [vmem:[%s391 + $0x98] sm:$0xff]
          %v742 = vld [vmem:[%s391 + $0xa0] sm:$0xff]
          %v743 = vld [vmem:[%s391 + $0xa8] sm:$0xff]
          %v744 = vld [vmem:[%s391 + $0xb0] sm:$0xff]
          %v745 = vld [vmem:[%s391 + $0xb8] sm:$0xff]
          %v746 = vld [vmem:[%s391 + $0xc0] sm:$0xff]
          %v747 = vld [vmem:[%s391 + $0xc8] sm:$0xff]
          %v748 = vld [vmem:[%s391 + $0xd0] sm:$0xff]
          %v749 = vld [vmem:[%s391 + $0xd8] sm:$0xff]
          %v750 = vld [vmem:[%s391 + $0xe0] sm:$0xff]
          %v751 = vld [vmem:[%s391 + $0xe8] sm:$0xff]
          %v752 = vld [vmem:[%s391 + $0xf0] sm:$0xff]
          %v753 = vld [vmem:[%s391 + $0xf8] sm:$0xff]
          %754 = vmatprep.subr.mxu0 0.0
          %755 = vmatpush1.msra.mxu0 %v738
          %756 = vmatprep.subr.mxu0 0.0
          %757 = vmatpush1.msra.mxu0 %v739
          %758 = vmatprep.subr.mxu0 0.0
          %759 = vmatpush1.msra.mxu0 %v740
          %760 = vmatprep.subr.mxu0 0.0
          %761 = vmatpush1.msra.mxu0 %v741
          %762 = vmatprep.subr.mxu0 0.0
          %763 = vmatpush1.msra.mxu0 %v742
          %764 = vmatprep.subr.mxu0 0.0
          %765 = vmatpush1.msra.mxu0 %v743
          %766 = vmatprep.subr.mxu0 0.0
          %767 = vmatpush1.msra.mxu0 %v744
          %768 = vmatprep.subr.mxu0 0.0
          %769 = vmatpush1.msra.mxu0 %v745
          %770 = vmatprep.subr.mxu0 0.0
          %771 = vmatpush1.msra.mxu0 %v746
          %772 = vmatprep.subr.mxu0 0.0
          %773 = vmatpush1.msra.mxu0 %v747
          %774 = vmatprep.subr.mxu0 0.0
          %775 = vmatpush1.msra.mxu0 %v748
          %776 = vmatprep.subr.mxu0 0.0
          %777 = vmatpush1.msra.mxu0 %v749
          %778 = vmatprep.subr.mxu0 0.0
          %779 = vmatpush1.msra.mxu0 %v750
          %780 = vmatprep.subr.mxu0 0.0
          %781 = vmatpush1.msra.mxu0 %v751
          %782 = vmatprep.subr.mxu0 0.0
          %783 = vmatpush1.msra.mxu0 %v752
          %784 = vmatprep.subr.mxu0 0.0
          %785 = vmatpush1.msra.mxu0 %v753
          %786 = vmatprep.subr.mxu0 0.0
          %787 = vmatpush1.msra.mxu0 0.0
          %788 = vmatprep.subr.mxu0 0.0
          %789 = vmatpush1.msra.mxu0 0.0
          %790 = vmatprep.subr.mxu0 0.0
          %791 = vmatpush1.msra.mxu0 0.0
          %792 = vmatprep.subr.mxu0 0.0
          %793 = vmatpush1.msra.mxu0 0.0
          %794 = vmatprep.subr.mxu0 0.0
          %795 = vmatpush1.msra.mxu0 0.0
          %796 = vmatprep.subr.mxu0 0.0
          %797 = vmatpush1.msra.mxu0 0.0
          %798 = vmatprep.subr.mxu0 0.0
          %799 = vmatpush1.msra.mxu0 0.0
          %800 = vmatprep.subr.mxu0 0.0
          %801 = vmatpush1.msra.mxu0 0.0
          %802 = vmatprep.subr.mxu0 0.0
          %803 = vmatpush1.msra.mxu0 0.0
          %804 = vmatprep.subr.mxu0 0.0
          %805 = vmatpush1.msra.mxu0 0.0
          %806 = vmatprep.subr.mxu0 0.0
          %807 = vmatpush1.msra.mxu0 0.0
          %808 = vmatprep.subr.mxu0 0.0
          %809 = vmatpush1.msra.mxu0 0.0
          %810 = vmatprep.subr.mxu0 0.0
          %811 = vmatpush1.msra.mxu0 0.0
          %812 = vmatprep.subr.mxu0 0.0
          %813 = vmatpush1.msra.mxu0 0.0
          %814 = vmatprep.subr.mxu0 0.0
          %815 = vmatpush1.msra.mxu0 0.0
          %816 = vmatprep.subr.mxu0 0.0
          %817 = vmatpush1.msra.mxu0 0.0
          %818 = vmatprep.mubr.f32.mxu0 0.0
          %819 = vmatmul.mubr.f32.gmra.mrb[0].mxu0 %v718
          %v820 = vpop.f32.mrb[0].mxu0
          %v821 = vadd.f32 0.0, %v820
          %v822 = vpop.f32.mrb[0].mxu0
          %823 = vmatprep.mubr.f32.mxu0 0.0
          %824 = vmatmul.mubr.f32.gmra.mrb[0].mxu0 %v719
          %v825 = vpop.f32.mrb[0].mxu0
          %v826 = vadd.f32 0.0, %v825
          %v827 = vpop.f32.mrb[0].mxu0
          %828 = vmatprep.mubr.f32.mxu0 0.0
          %829 = vmatmul.mubr.f32.gmra.mrb[0].mxu0 %v720
          %v830 = vpop.f32.mrb[0].mxu0
          %v831 = vadd.f32 0.0, %v830
          %v832 = vpop.f32.mrb[0].mxu0
          %833 = vmatprep.mubr.f32.mxu0 0.0
          %834 = vmatmul.mubr.f32.gmra.mrb[0].mxu0 %v721
          %v835 = vpop.f32.mrb[0].mxu0
          %v836 = vadd.f32 0.0, %v835
          %v837 = vpop.f32.mrb[0].mxu0
          %838 = vdwg.mxu0
          %839 = vmatprep.subr.mxu0 0.0
          %840 = vmatpush1.msra.mxu0 %v722
          %841 = vmatprep.subr.mxu0 0.0
          %842 = vmatpush1.msra.mxu0 %v723
          %843 = vmatprep.subr.mxu0 0.0
          %844 = vmatpush1.msra.mxu0 %v724
          %845 = vmatprep.subr.mxu0 0.0
          %846 = vmatpush1.msra.mxu0 %v725
          %847 = vmatprep.subr.mxu0 0.0
          %848 = vmatpush1.msra.mxu0 %v726
          %849 = vmatprep.subr.mxu0 0.0
          %850 = vmatpush1.msra.mxu0 %v727
          %851 = vmatprep.subr.mxu0 0.0
          %852 = vmatpush1.msra.mxu0 %v728
          %853 = vmatprep.subr.mxu0 0.0
          %854 = vmatpush1.msra.mxu0 %v729
          %855 = vmatprep.subr.mxu0 0.0
          %856 = vmatpush1.msra.mxu0 %v730
          %857 = vmatprep.subr.mxu0 0.0
          %858 = vmatpush1.msra.mxu0 %v731
          %859 = vmatprep.subr.mxu0 0.0
          %860 = vmatpush1.msra.mxu0 %v732
          %861 = vmatprep.subr.mxu0 0.0
          %862 = vmatpush1.msra.mxu0 %v733
          %863 = vmatprep.subr.mxu0 0.0
          %864 = vmatpush1.msra.mxu0 %v734
          %865 = vmatprep.subr.mxu0 0.0
          %866 = vmatpush1.msra.mxu0 %v735
          %867 = vmatprep.subr.mxu0 0.0
          %868 = vmatpush1.msra.mxu0 %v736
          %869 = vmatprep.subr.mxu0 0.0
          %870 = vmatpush1.msra.mxu0 %v737
          %871 = vmatprep.subr.mxu0 0.0
          %872 = vmatpush1.msra.mxu0 0.0
          %873 = vmatprep.subr.mxu0 0.0
          %874 = vmatpush1.msra.mxu0 0.0
          %875 = vmatprep.subr.mxu0 0.0
          %876 = vmatpush1.msra.mxu0 0.0
          %877 = vmatprep.subr.mxu0 0.0
          %878 = vmatpush1.msra.mxu0 0.0
          %879 = vmatprep.subr.mxu0 0.0
          %880 = vmatpush1.msra.mxu0 0.0
          %881 = vmatprep.subr.mxu0 0.0
          %882 = vmatpush1.msra.mxu0 0.0
          %883 = vmatprep.subr.mxu0 0.0
          %884 = vmatpush1.msra.mxu0 0.0
          %885 = vmatprep.subr.mxu0 0.0
          %886 = vmatpush1.msra.mxu0 0.0
          %887 = vmatprep.subr.mxu0 0.0
          %888 = vmatpush1.msra.mxu0 0.0
          %889 = vmatprep.subr.mxu0 0.0
          %890 = vmatpush1.msra.mxu0 0.0
          %891 = vmatprep.subr.mxu0 0.0
          %892 = vmatpush1.msra.mxu0 0.0
          %893 = vmatprep.subr.mxu0 0.0
          %894 = vmatpush1.msra.mxu0 0.0
          %895 = vmatprep.subr.mxu0 0.0
          %896 = vmatpush1.msra.mxu0 0.0
          %897 = vmatprep.subr.mxu0 0.0
          %898 = vmatpush1.msra.mxu0 0.0
          %899 = vmatprep.subr.mxu0 0.0
          %900 = vmatpush1.msra.mxu0 0.0
          %901 = vmatprep.subr.mxu0 0.0
          %902 = vmatpush1.msra.mxu0 0.0
          %903 = vmatprep.mubr.f32.mxu0 0.0
          %904 = vmatmul.mubr.f32.gmra.mrb[0].mxu0 %v713
          %v905 = vpop.f32.mrb[0].mxu0
          %v906 = vadd.f32 %v821, %v905
          %v907 = vpop.f32.mrb[0].mxu0
          %908 = vmatprep.mubr.f32.mxu0 0.0
          %909 = vmatmul.mubr.f32.gmra.mrb[0].mxu0 %v714
          %v910 = vpop.f32.mrb[0].mxu0
          %v911 = vadd.f32 %v826, %v910
          %v912 = vpop.f32.mrb[0].mxu0
          %913 = vmatprep.mubr.f32.mxu0 0.0
          %914 = vmatmul.mubr.f32.gmra.mrb[0].mxu0 %v715
          %v915 = vpop.f32.mrb[0].mxu0
          %v916 = vadd.f32 %v831, %v915
          %v917 = vpop.f32.mrb[0].mxu0
          %918 = vmatprep.mubr.f32.mxu0 0.0
          %919 = vmatmul.mubr.f32.gmra.mrb[0].mxu0 %v716
          %v920 = vpop.f32.mrb[0].mxu0
          %v921 = vadd.f32 %v836, %v920
          %v922 = vpop.f32.mrb[0].mxu0
          %923 = vdwg.mxu0
          %v924 = vld [vmem:[%s400] sm:$0x1]
          %v925 = vlaneseq
          %v926 = vshrl.u32 %v925, 7
          %v927 = vsub.s32 0, %v926
          %v928 = vrot.slane %v924, %v927
          %v929 = vadd.f32 %v906, %v928
          %v930 = vadd.f32 %v911, %v928
          %v931 = vadd.f32 %v916, %v928
          %v932 = vadd.f32 %v921, %v928
          %v933 = vmax.f32 %v929, 0.0
          %v934 = vmax.f32 %v930, 0.0
          %v935 = vmax.f32 %v931, 0.0
          %v936 = vmax.f32 %v932, 0.0
          %s937 = smul.u32 %s506, 32
          %s938 = scalar_lea.vmem [#allocation2], %s937
          %s939 = scalar_lea.vmem %s938, %s471 [#allocation2]
          %940 = vst [vmem:[%s939] sm:$0xff] %v933
          %941 = vst [vmem:[%s939 + $0x8] sm:$0xff] %v934
          %942 = vst [vmem:[%s939 + $0x10] sm:$0xff] %v935
          %943 = vst [vmem:[%s939 + $0x18] sm:$0xff] %v936
          %v944 = vld [vmem:[#allocation3] sm:$0x1]
          %v945 = vadd.f32 %v933, %v934
          %v946 = vadd.f32 %v945, %v935
          %v947 = vadd.f32 %v946, %v936
          %v948 = vrot.slane %v947, 4
          %v949 = vadd.f32 %v947, %v948
          %v950 = vrot.slane %v949, 2
          %v951 = vadd.f32 %v949, %v950
          %v952 = vrot.slane %v951, 1
          %v953 = vadd.f32 %v951, %v952
          %v954 = vadd.f32 %v944, %v953
          %955 = vst [vmem:[#allocation3] sm:$0x1] %v954
          %v956 = vld [vmem:[#allocation3 + $0x1] sm:$0x1]
          %v957 = vmul.f32 %v933, %v933
          %v958 = vmul.f32 %v934, %v934
          %v959 = vmul.f32 %v935, %v935
          %v960 = vmul.f32 %v936, %v936
          %v961 = vadd.f32 %v957, %v958
          %v962 = vadd.f32 %v961, %v959
          %v963 = vadd.f32 %v962, %v960
          %v964 = vrot.slane %v963, 4
          %v965 = vadd.f32 %v963, %v964
          %v966 = vrot.slane %v965, 2
          %v967 = vadd.f32 %v965, %v966
          %v968 = vrot.slane %v967, 1
          %v969 = vadd.f32 %v967, %v968
          %v970 = vadd.f32 %v956, %v969
          %971 = vst [vmem:[#allocation3 + $0x1] sm:$0x1] %v970
          // Predicated region
          $region73: #{tpu_custom_call.1} parent=67 // pred_check
            %p972 = pneg %p507
          $region74: #{tpu_custom_call.1} parent=67 // pred_check_branch
            %974 = sbr.rel (%p972) target = $region76
          $region75: #{tpu_custom_call.1} parent=67 // pred_region
            %v975 = vld [vmem:[#allocation3] sm:$0x1]
            %v976 = vmul.f32 %v975, 0.03125
            %v977 = vld [vmem:[#allocation3 + $0x1] sm:$0x1]
            %v978 = vmul.f32 %v977, 0.03125
            %v979 = vmul.f32 %v976, %v976
            %v980 = vsub.f32 %v978, %v979
            %v981 = vmax.f32 %v980, 0.0
            %v982 = vld [vmem:[%s400 + $0x1] sm:$0x1]
            %v983 = vadd.f32 %v981, 1e-05
            %v984 = vrsqrt.pop %v983
            %v985 = vmul.f32 %v982, %v984
            %v986 = vld [vmem:[%s400 + $0x2] sm:$0x1]
            %v987 = vmul.f32 %v976, %v985
            %v988 = vsub.f32 %v986, %v987
            %p989 = scmp.le.s32.totalorder %s32, 2
            // Predicated region
            $region77: #{tpu_custom_call.1} parent=75 // pred_check
              %p990 = pneg %p989
            $region78: #{tpu_custom_call.1} parent=75 // pred_check_branch
              %992 = sbr.rel (%p990) target = $region80
            $region79: #{tpu_custom_call.1} parent=75 // pred_region
              %v993 = vld [vmem:[%s938] sm:$0xff]
              %v994 = vld [vmem:[%s938 + $0x8] sm:$0xff]
              %v995 = vld [vmem:[%s938 + $0x10] sm:$0xff]
              %v996 = vld [vmem:[%s938 + $0x18] sm:$0xff]
              %v997 = vlaneseq
              %v998 = vshrl.u32 %v997, 7
              %v999 = vsub.s32 0, %v998
              %v1000 = vrot.slane %v985, %v999
              %v1001 = vmul.f32 %v993, %v1000
              %v1002 = vmul.f32 %v994, %v1000
              %v1003 = vmul.f32 %v995, %v1000
              %v1004 = vmul.f32 %v996, %v1000
              %v1005 = vlaneseq
              %v1006 = vshrl.u32 %v1005, 7
              %v1007 = vsub.s32 0, %v1006
              %v1008 = vrot.slane %v988, %v1007
              %v1009 = vadd.f32 %v1001, %v1008
              %v1010 = vadd.f32 %v1002, %v1008
              %v1011 = vadd.f32 %v1003, %v1008
              %v1012 = vadd.f32 %v1004, %v1008
              %1013 = vst [vmem:[%s938] sm:$0xff] %v1009
              %1014 = vst [vmem:[%s938 + $0x8] sm:$0xff] %v1010
              %1015 = vst [vmem:[%s938 + $0x10] sm:$0xff] %v1011
              %1016 = vst [vmem:[%s938 + $0x18] sm:$0xff] %v1012
            $region80: #{tpu_custom_call.1} parent=75 // pred_fallthru
              _
            %p1017 = scmp.eq.s32.totalorder %s32, 3
            // Predicated region
            $region81: #{tpu_custom_call.1} parent=75 // pred_check
              %p1018 = pneg %p1017
            $region82: #{tpu_custom_call.1} parent=75 // pred_check_branch
              %1020 = sbr.rel (%p1018) target = $region84
            $region83: #{tpu_custom_call.1} parent=75 // pred_region
              %1021 = vst [vmem:[#allocation3 + $0x2] sm:$0x1] %v985
              %1022 = vst [vmem:[#allocation3 + $0x3] sm:$0x1] %v988
            $region84: #{tpu_custom_call.1} parent=75 // pred_fallthru
              _
          $region76: #{tpu_custom_call.1} parent=67 // pred_fallthru
            _
        $region68: #{tpu_custom_call.1} parent=39 // pred_fallthru
          _
        %p1023 = scmp.eq.s32.totalorder %s32, 4
        // Predicated region
        $region85: #{tpu_custom_call.1} parent=39 // pred_check
          %p1024 = pneg %p1023
        $region86: #{tpu_custom_call.1} parent=39 // pred_check_branch
          %1026 = sbr.rel (%p1024) target = $region88
        $region87: #{tpu_custom_call.1} parent=39 // pred_region
          %s1027 = scalar_lea.vmem [#allocation2], %s471
          %v1028 = vld [vmem:[%s1027] sm:$0xff]
          %v1029 = vld [vmem:[%s1027 + $0x8] sm:$0xff]
          %v1030 = vld [vmem:[%s1027 + $0x10] sm:$0xff]
          %v1031 = vld [vmem:[%s1027 + $0x18] sm:$0xff]
          %s1032 = scalar_lea.vmem [#allocation2], 32
          %s1033 = scalar_lea.vmem %s1032, %s471 [#allocation2]
          %v1034 = vld [vmem:[%s1033] sm:$0xff]
          %v1035 = vld [vmem:[%s1033 + $0x8] sm:$0xff]
          %v1036 = vld [vmem:[%s1033 + $0x10] sm:$0xff]
          %v1037 = vld [vmem:[%s1033 + $0x18] sm:$0xff]
          %s1038 = scalar_lea.vmem [#allocation2], 64
          %s1039 = scalar_lea.vmem %s1038, %s471 [#allocation2]
          %v1040 = vld [vmem:[%s1039] sm:$0xff]
          %v1041 = vld [vmem:[%s1039 + $0x8] sm:$0xff]
          %v1042 = vld [vmem:[%s1039 + $0x10] sm:$0xff]
          %v1043 = vld [vmem:[%s1039 + $0x18] sm:$0xff]
          %v1044 = vld [vmem:[#allocation3 + $0x2] sm:$0x1]
          %v1045 = vlaneseq
          %v1046 = vshrl.u32 %v1045, 7
          %v1047 = vsub.s32 0, %v1046
          %v1048 = vrot.slane %v1044, %v1047
          %v1049 = vmul.f32 %v1040, %v1048
          %v1050 = vmul.f32 %v1041, %v1048
          %v1051 = vmul.f32 %v1042, %v1048
          %v1052 = vmul.f32 %v1043, %v1048
          %v1053 = vld [vmem:[#allocation3 + $0x3] sm:$0x1]
          %v1054 = vlaneseq
          %v1055 = vshrl.u32 %v1054, 7
          %v1056 = vsub.s32 0, %v1055
          %v1057 = vrot.slane %v1053, %v1056
          %v1058 = vadd.f32 %v1049, %v1057
          %v1059 = vadd.f32 %v1050, %v1057
          %v1060 = vadd.f32 %v1051, %v1057
          %v1061 = vadd.f32 %v1052, %v1057
          %v1062 = vld [vmem:[#allocation12] sm:$0xff]
          %v1063 = vld [vmem:[#allocation12 + $0x8] sm:$0xff]
          %v1064 = vld [vmem:[#allocation12 + $0x10] sm:$0xff]
          %v1065 = vld [vmem:[#allocation12 + $0x18] sm:$0xff]
          %v1066 = vld [vmem:[#allocation12 + $0x20] sm:$0xff]
          %v1067 = vld [vmem:[#allocation12 + $0x28] sm:$0xff]
          %v1068 = vld [vmem:[#allocation12 + $0x30] sm:$0xff]
          %v1069 = vld [vmem:[#allocation12 + $0x38] sm:$0xff]
          %v1070 = vld [vmem:[#allocation12 + $0x40] sm:$0xff]
          %v1071 = vld [vmem:[#allocation12 + $0x48] sm:$0xff]
          %v1072 = vld [vmem:[#allocation12 + $0x50] sm:$0xff]
          %v1073 = vld [vmem:[#allocation12 + $0x58] sm:$0xff]
          %v1074 = vld [vmem:[#allocation12 + $0x60] sm:$0xff]
          %v1075 = vld [vmem:[#allocation12 + $0x68] sm:$0xff]
          %v1076 = vld [vmem:[#allocation12 + $0x70] sm:$0xff]
          %v1077 = vld [vmem:[#allocation12 + $0x78] sm:$0xff]
          %s1078 = scalar_lea.vmem [#allocation12], 128
          %v1079 = vld [vmem:[%s1078] sm:$0xff]
          %v1080 = vld [vmem:[%s1078 + $0x8] sm:$0xff]
          %v1081 = vld [vmem:[%s1078 + $0x10] sm:$0xff]
          %v1082 = vld [vmem:[%s1078 + $0x18] sm:$0xff]
          %v1083 = vld [vmem:[%s1078 + $0x20] sm:$0xff]
          %v1084 = vld [vmem:[%s1078 + $0x28] sm:$0xff]
          %v1085 = vld [vmem:[%s1078 + $0x30] sm:$0xff]
          %v1086 = vld [vmem:[%s1078 + $0x38] sm:$0xff]
          %v1087 = vld [vmem:[%s1078 + $0x40] sm:$0xff]
          %v1088 = vld [vmem:[%s1078 + $0x48] sm:$0xff]
          %v1089 = vld [vmem:[%s1078 + $0x50] sm:$0xff]
          %v1090 = vld [vmem:[%s1078 + $0x58] sm:$0xff]
          %v1091 = vld [vmem:[%s1078 + $0x60] sm:$0xff]
          %v1092 = vld [vmem:[%s1078 + $0x68] sm:$0xff]
          %v1093 = vld [vmem:[%s1078 + $0x70] sm:$0xff]
          %v1094 = vld [vmem:[%s1078 + $0x78] sm:$0xff]
          %1095 = vmatprep.subr.mxu0 0.0
          %1096 = vmatpush1.msra.mxu0 %v1079
          %1097 = vmatprep.subr.mxu0 0.0
          %1098 = vmatpush1.msra.mxu0 %v1080
          %1099 = vmatprep.subr.mxu0 0.0
          %1100 = vmatpush1.msra.mxu0 %v1081
          %1101 = vmatprep.subr.mxu0 0.0
          %1102 = vmatpush1.msra.mxu0 %v1082
          %1103 = vmatprep.subr.mxu0 0.0
          %1104 = vmatpush1.msra.mxu0 %v1083
          %1105 = vmatprep.subr.mxu0 0.0
          %1106 = vmatpush1.msra.mxu0 %v1084
          %1107 = vmatprep.subr.mxu0 0.0
          %1108 = vmatpush1.msra.mxu0 %v1085
          %1109 = vmatprep.subr.mxu0 0.0
          %1110 = vmatpush1.msra.mxu0 %v1086
          %1111 = vmatprep.subr.mxu0 0.0
          %1112 = vmatpush1.msra.mxu0 %v1087
          %1113 = vmatprep.subr.mxu0 0.0
          %1114 = vmatpush1.msra.mxu0 %v1088
          %1115 = vmatprep.subr.mxu0 0.0
          %1116 = vmatpush1.msra.mxu0 %v1089
          %1117 = vmatprep.subr.mxu0 0.0
          %1118 = vmatpush1.msra.mxu0 %v1090
          %1119 = vmatprep.subr.mxu0 0.0
          %1120 = vmatpush1.msra.mxu0 %v1091
          %1121 = vmatprep.subr.mxu0 0.0
          %1122 = vmatpush1.msra.mxu0 %v1092
          %1123 = vmatprep.subr.mxu0 0.0
          %1124 = vmatpush1.msra.mxu0 %v1093
          %1125 = vmatprep.subr.mxu0 0.0
          %1126 = vmatpush1.msra.mxu0 %v1094
          %1127 = vmatprep.subr.mxu0 0.0
          %1128 = vmatpush1.msra.mxu0 0.0
          %1129 = vmatprep.subr.mxu0 0.0
          %1130 = vmatpush1.msra.mxu0 0.0
          %1131 = vmatprep.subr.mxu0 0.0
          %1132 = vmatpush1.msra.mxu0 0.0
          %1133 = vmatprep.subr.mxu0 0.0
          %1134 = vmatpush1.msra.mxu0 0.0
          %1135 = vmatprep.subr.mxu0 0.0
          %1136 = vmatpush1.msra.mxu0 0.0
          %1137 = vmatprep.subr.mxu0 0.0
          %1138 = vmatpush1.msra.mxu0 0.0
          %1139 = vmatprep.subr.mxu0 0.0
          %1140 = vmatpush1.msra.mxu0 0.0
          %1141 = vmatprep.subr.mxu0 0.0
          %1142 = vmatpush1.msra.mxu0 0.0
          %1143 = vmatprep.subr.mxu0 0.0
          %1144 = vmatpush1.msra.mxu0 0.0
          %1145 = vmatprep.subr.mxu0 0.0
          %1146 = vmatpush1.msra.mxu0 0.0
          %1147 = vmatprep.subr.mxu0 0.0
          %1148 = vmatpush1.msra.mxu0 0.0
          %1149 = vmatprep.subr.mxu0 0.0
          %1150 = vmatpush1.msra.mxu0 0.0
          %1151 = vmatprep.subr.mxu0 0.0
          %1152 = vmatpush1.msra.mxu0 0.0
          %1153 = vmatprep.subr.mxu0 0.0
          %1154 = vmatpush1.msra.mxu0 0.0
          %1155 = vmatprep.subr.mxu0 0.0
          %1156 = vmatpush1.msra.mxu0 0.0
          %1157 = vmatprep.subr.mxu0 0.0
          %1158 = vmatpush1.msra.mxu0 0.0
          %1159 = vmatprep.mubr.f32.mxu0 0.0
          %1160 = vmatmul.mubr.f32.gmra.mrb[0].mxu0 %v1034
          %v1161 = vpop.f32.mrb[0].mxu0
          %v1162 = vadd.f32 0.0, %v1161
          %v1163 = vpop.f32.mrb[0].mxu0
          %1164 = vmatprep.mubr.f32.mxu0 0.0
          %1165 = vmatmul.mubr.f32.gmra.mrb[0].mxu0 %v1035
          %v1166 = vpop.f32.mrb[0].mxu0
          %v1167 = vadd.f32 0.0, %v1166
          %v1168 = vpop.f32.mrb[0].mxu0
          %1169 = vmatprep.mubr.f32.mxu0 0.0
          %1170 = vmatmul.mubr.f32.gmra.mrb[0].mxu0 %v1036
          %v1171 = vpop.f32.mrb[0].mxu0
          %v1172 = vadd.f32 0.0, %v1171
          %v1173 = vpop.f32.mrb[0].mxu0
          %1174 = vmatprep.mubr.f32.mxu0 0.0
          %1175 = vmatmul.mubr.f32.gmra.mrb[0].mxu0 %v1037
          %v1176 = vpop.f32.mrb[0].mxu0
          %v1177 = vadd.f32 0.0, %v1176
          %v1178 = vpop.f32.mrb[0].mxu0
          %1179 = vdwg.mxu0
          %1180 = vmatprep.subr.mxu0 0.0
          %1181 = vmatpush1.msra.mxu0 %v1062
          %1182 = vmatprep.subr.mxu0 0.0
          %1183 = vmatpush1.msra.mxu0 %v1063
          %1184 = vmatprep.subr.mxu0 0.0
          %1185 = vmatpush1.msra.mxu0 %v1064
          %1186 = vmatprep.subr.mxu0 0.0
          %1187 = vmatpush1.msra.mxu0 %v1065
          %1188 = vmatprep.subr.mxu0 0.0
          %1189 = vmatpush1.msra.mxu0 %v1066
          %1190 = vmatprep.subr.mxu0 0.0
          %1191 = vmatpush1.msra.mxu0 %v1067
          %1192 = vmatprep.subr.mxu0 0.0
          %1193 = vmatpush1.msra.mxu0 %v1068
          %1194 = vmatprep.subr.mxu0 0.0
          %1195 = vmatpush1.msra.mxu0 %v1069
          %1196 = vmatprep.subr.mxu0 0.0
          %1197 = vmatpush1.msra.mxu0 %v1070
          %1198 = vmatprep.subr.mxu0 0.0
          %1199 = vmatpush1.msra.mxu0 %v1071
          %1200 = vmatprep.subr.mxu0 0.0
          %1201 = vmatpush1.msra.mxu0 %v1072
          %1202 = vmatprep.subr.mxu0 0.0
          %1203 = vmatpush1.msra.mxu0 %v1073
          %1204 = vmatprep.subr.mxu0 0.0
          %1205 = vmatpush1.msra.mxu0 %v1074
          %1206 = vmatprep.subr.mxu0 0.0
          %1207 = vmatpush1.msra.mxu0 %v1075
          %1208 = vmatprep.subr.mxu0 0.0
          %1209 = vmatpush1.msra.mxu0 %v1076
          %1210 = vmatprep.subr.mxu0 0.0
          %1211 = vmatpush1.msra.mxu0 %v1077
          %1212 = vmatprep.subr.mxu0 0.0
          %1213 = vmatpush1.msra.mxu0 0.0
          %1214 = vmatprep.subr.mxu0 0.0
          %1215 = vmatpush1.msra.mxu0 0.0
          %1216 = vmatprep.subr.mxu0 0.0
          %1217 = vmatpush1.msra.mxu0 0.0
          %1218 = vmatprep.subr.mxu0 0.0
          %1219 = vmatpush1.msra.mxu0 0.0
          %1220 = vmatprep.subr.mxu0 0.0
          %1221 = vmatpush1.msra.mxu0 0.0
          %1222 = vmatprep.subr.mxu0 0.0
          %1223 = vmatpush1.msra.mxu0 0.0
          %1224 = vmatprep.subr.mxu0 0.0
          %1225 = vmatpush1.msra.mxu0 0.0
          %1226 = vmatprep.subr.mxu0 0.0
          %1227 = vmatpush1.msra.mxu0 0.0
          %1228 = vmatprep.subr.mxu0 0.0
          %1229 = vmatpush1.msra.mxu0 0.0
          %1230 = vmatprep.subr.mxu0 0.0
          %1231 = vmatpush1.msra.mxu0 0.0
          %1232 = vmatprep.subr.mxu0 0.0
          %1233 = vmatpush1.msra.mxu0 0.0
          %1234 = vmatprep.subr.mxu0 0.0
          %1235 = vmatpush1.msra.mxu0 0.0
          %1236 = vmatprep.subr.mxu0 0.0
          %1237 = vmatpush1.msra.mxu0 0.0
          %1238 = vmatprep.subr.mxu0 0.0
          %1239 = vmatpush1.msra.mxu0 0.0
          %1240 = vmatprep.subr.mxu0 0.0
          %1241 = vmatpush1.msra.mxu0 0.0
          %1242 = vmatprep.subr.mxu0 0.0
          %1243 = vmatpush1.msra.mxu0 0.0
          %1244 = vmatprep.mubr.f32.mxu0 0.0
          %1245 = vmatmul.mubr.f32.gmra.mrb[0].mxu0 %v1028
          %v1246 = vpop.f32.mrb[0].mxu0
          %v1247 = vadd.f32 %v1162, %v1246
          %v1248 = vpop.f32.mrb[0].mxu0
          %1249 = vmatprep.mubr.f32.mxu0 0.0
          %1250 = vmatmul.mubr.f32.gmra.mrb[0].mxu0 %v1029
          %v1251 = vpop.f32.mrb[0].mxu0
          %v1252 = vadd.f32 %v1167, %v1251
          %v1253 = vpop.f32.mrb[0].mxu0
          %1254 = vmatprep.mubr.f32.mxu0 0.0
          %1255 = vmatmul.mubr.f32.gmra.mrb[0].mxu0 %v1030
          %v1256 = vpop.f32.mrb[0].mxu0
          %v1257 = vadd.f32 %v1172, %v1256
          %v1258 = vpop.f32.mrb[0].mxu0
          %1259 = vmatprep.mubr.f32.mxu0 0.0
          %1260 = vmatmul.mubr.f32.gmra.mrb[0].mxu0 %v1031
          %v1261 = vpop.f32.mrb[0].mxu0
          %v1262 = vadd.f32 %v1177, %v1261
          %v1263 = vpop.f32.mrb[0].mxu0
          %1264 = vdwg.mxu0
          %s1265 = scalar_lea.vmem [#allocation12], 256
          %v1266 = vld [vmem:[%s1265] sm:$0xff]
          %v1267 = vld [vmem:[%s1265 + $0x8] sm:$0xff]
          %v1268 = vld [vmem:[%s1265 + $0x10] sm:$0xff]
          %v1269 = vld [vmem:[%s1265 + $0x18] sm:$0xff]
          %v1270 = vld [vmem:[%s1265 + $0x20] sm:$0xff]
          %v1271 = vld [vmem:[%s1265 + $0x28] sm:$0xff]
          %v1272 = vld [vmem:[%s1265 + $0x30] sm:$0xff]
          %v1273 = vld [vmem:[%s1265 + $0x38] sm:$0xff]
          %v1274 = vld [vmem:[%s1265 + $0x40] sm:$0xff]
          %v1275 = vld [vmem:[%s1265 + $0x48] sm:$0xff]
          %v1276 = vld [vmem:[%s1265 + $0x50] sm:$0xff]
          %v1277 = vld [vmem:[%s1265 + $0x58] sm:$0xff]
          %v1278 = vld [vmem:[%s1265 + $0x60] sm:$0xff]
          %v1279 = vld [vmem:[%s1265 + $0x68] sm:$0xff]
          %v1280 = vld [vmem:[%s1265 + $0x70] sm:$0xff]
          %v1281 = vld [vmem:[%s1265 + $0x78] sm:$0xff]
          %1282 = vmatprep.subr.mxu0 0.0
          %1283 = vmatpush1.msra.mxu0 %v1266
          %1284 = vmatprep.subr.mxu0 0.0
          %1285 = vmatpush1.msra.mxu0 %v1267
          %1286 = vmatprep.subr.mxu0 0.0
          %1287 = vmatpush1.msra.mxu0 %v1268
          %1288 = vmatprep.subr.mxu0 0.0
          %1289 = vmatpush1.msra.mxu0 %v1269
          %1290 = vmatprep.subr.mxu0 0.0
          %1291 = vmatpush1.msra.mxu0 %v1270
          %1292 = vmatprep.subr.mxu0 0.0
          %1293 = vmatpush1.msra.mxu0 %v1271
          %1294 = vmatprep.subr.mxu0 0.0
          %1295 = vmatpush1.msra.mxu0 %v1272
          %1296 = vmatprep.subr.mxu0 0.0
          %1297 = vmatpush1.msra.mxu0 %v1273
          %1298 = vmatprep.subr.mxu0 0.0
          %1299 = vmatpush1.msra.mxu0 %v1274
          %1300 = vmatprep.subr.mxu0 0.0
          %1301 = vmatpush1.msra.mxu0 %v1275
          %1302 = vmatprep.subr.mxu0 0.0
          %1303 = vmatpush1.msra.mxu0 %v1276
          %1304 = vmatprep.subr.mxu0 0.0
          %1305 = vmatpush1.msra.mxu0 %v1277
          %1306 = vmatprep.subr.mxu0 0.0
          %1307 = vmatpush1.msra.mxu0 %v1278
          %1308 = vmatprep.subr.mxu0 0.0
          %1309 = vmatpush1.msra.mxu0 %v1279
          %1310 = vmatprep.subr.mxu0 0.0
          %1311 = vmatpush1.msra.mxu0 %v1280
          %1312 = vmatprep.subr.mxu0 0.0
          %1313 = vmatpush1.msra.mxu0 %v1281
          %1314 = vmatprep.subr.mxu0 0.0
          %1315 = vmatpush1.msra.mxu0 0.0
          %1316 = vmatprep.subr.mxu0 0.0
          %1317 = vmatpush1.msra.mxu0 0.0
          %1318 = vmatprep.subr.mxu0 0.0
          %1319 = vmatpush1.msra.mxu0 0.0
          %1320 = vmatprep.subr.mxu0 0.0
          %1321 = vmatpush1.msra.mxu0 0.0
          %1322 = vmatprep.subr.mxu0 0.0
          %1323 = vmatpush1.msra.mxu0 0.0
          %1324 = vmatprep.subr.mxu0 0.0
          %1325 = vmatpush1.msra.mxu0 0.0
          %1326 = vmatprep.subr.mxu0 0.0
          %1327 = vmatpush1.msra.mxu0 0.0
          %1328 = vmatprep.subr.mxu0 0.0
          %1329 = vmatpush1.msra.mxu0 0.0
          %1330 = vmatprep.subr.mxu0 0.0
          %1331 = vmatpush1.msra.mxu0 0.0
          %1332 = vmatprep.subr.mxu0 0.0
          %1333 = vmatpush1.msra.mxu0 0.0
          %1334 = vmatprep.subr.mxu0 0.0
          %1335 = vmatpush1.msra.mxu0 0.0
          %1336 = vmatprep.subr.mxu0 0.0
          %1337 = vmatpush1.msra.mxu0 0.0
          %1338 = vmatprep.subr.mxu0 0.0
          %1339 = vmatpush1.msra.mxu0 0.0
          %1340 = vmatprep.subr.mxu0 0.0
          %1341 = vmatpush1.msra.mxu0 0.0
          %1342 = vmatprep.subr.mxu0 0.0
          %1343 = vmatpush1.msra.mxu0 0.0
          %1344 = vmatprep.subr.mxu0 0.0
          %1345 = vmatpush1.msra.mxu0 0.0
          %1346 = vmatprep.mubr.f32.mxu0 0.0
          %1347 = vmatmul.mubr.f32.gmra.mrb[0].mxu0 %v1058
          %v1348 = vpop.f32.mrb[0].mxu0
          %v1349 = vadd.f32 0.0, %v1348
          %v1350 = vpop.f32.mrb[0].mxu0
          %1351 = vmatprep.mubr.f32.mxu0 0.0
          %1352 = vmatmul.mubr.f32.gmra.mrb[0].mxu0 %v1059
          %v1353 = vpop.f32.mrb[0].mxu0
          %v1354 = vadd.f32 0.0, %v1353
          %v1355 = vpop.f32.mrb[0].mxu0
          %1356 = vmatprep.mubr.f32.mxu0 0.0
          %1357 = vmatmul.mubr.f32.gmra.mrb[0].mxu0 %v1060
          %v1358 = vpop.f32.mrb[0].mxu0
          %v1359 = vadd.f32 0.0, %v1358
          %v1360 = vpop.f32.mrb[0].mxu0
          %1361 = vmatprep.mubr.f32.mxu0 0.0
          %1362 = vmatmul.mubr.f32.gmra.mrb[0].mxu0 %v1061
          %v1363 = vpop.f32.mrb[0].mxu0
          %v1364 = vadd.f32 0.0, %v1363
          %v1365 = vpop.f32.mrb[0].mxu0
          %1366 = vdwg.mxu0
          %v1367 = vadd.f32 %v1247, %v1349
          %v1368 = vadd.f32 %v1252, %v1354
          %v1369 = vadd.f32 %v1257, %v1359
          %v1370 = vadd.f32 %v1262, %v1364
          %v1371 = vld [vmem:[%s400 + $0x3] sm:$0x1]
          %v1372 = vlaneseq
          %v1373 = vshrl.u32 %v1372, 7
          %v1374 = vsub.s32 0, %v1373
          %v1375 = vrot.slane %v1371, %v1374
          %v1376 = vadd.f32 %v1367, %v1375
          %v1377 = vadd.f32 %v1368, %v1375
          %v1378 = vadd.f32 %v1369, %v1375
          %v1379 = vadd.f32 %v1370, %v1375
          %v1380 = vmax.f32 %v1376, 0.0
          %v1381 = vmax.f32 %v1377, 0.0
          %v1382 = vmax.f32 %v1378, 0.0
          %v1383 = vmax.f32 %v1379, 0.0
          %1384 = vst [vmem:[%s445] sm:$0xff] %v1380
          %1385 = vst [vmem:[%s445 + $0x8] sm:$0xff] %v1381
          %1386 = vst [vmem:[%s445 + $0x10] sm:$0xff] %v1382
          %1387 = vst [vmem:[%s445 + $0x18] sm:$0xff] %v1383
        $region88: #{tpu_custom_call.1} parent=39 // pred_fallthru
          _
        %s1388 = sand.u32 %s217, 1
        %s1389 = scalar_lea.sflag [#allocation6], %s1388
        %s1390 = sand.u32 %s217, 1
        %s1391 = smul.addr %s1390, 32
        %s1392 = scalar_lea.vmem [#allocation13], %s1391
        // Predicated region
        $region89: #{tpu_custom_call.1} parent=39 // pred_check
          %p1393 = pneg %p227
        $region90: #{tpu_custom_call.1} parent=39 // pred_check_branch
          %1395 = sbr.rel (%p1393) target = $region92
        $region91: #{tpu_custom_call.1} parent=39 // pred_region
          %p1396 = scmp.eq.s32.totalorder %s32, 4
          %s1397 = scalar_select %p1396, 1, 0
          %s1398 = smul.u32 %s33, %s1397
          %s1399 = smul.u32 2, %s1398
          %s1401 = ssub.s32 512, 512
          %1402 = vsyncadd %s1389, %s1401
          %s1403 = smul.addr %s1399, 128
          %s1404 = scalar_lea.hbm %s5, %s1403
          %s1405 = sshll.u32 %s1392, 4
          %s1406 = int_to_ptr.vmem [resolvable:$true] %s1405
          %1411 = dma.vmem_to_hbm [thread:$0]  %s1406, 512, %s1404, %s1389, 128, 128, 8
        $region92: #{tpu_custom_call.1} parent=39 // pred_fallthru
          _
      $region40: #{tpu_custom_call.1} parent=5 // pred_fallthru
        _
      %p1412 = scmp.le.s32.totalorder 2, %s23
      // Predicated region
      $region93: #{tpu_custom_call.1} parent=5 // pred_check
        %p1413 = pneg %p1412
      $region94: #{tpu_custom_call.1} parent=5 // pred_check_branch
        %1415 = sbr.rel (%p1413) target = $region96
      $region95: #{tpu_custom_call.1} parent=5 // pred_region
        %s1416 = ssub.s32 %s23, 2
        // Predicated region
        $region97: #{tpu_custom_call.1} parent=95 // pred_check
          %p1417 = pneg %p233
        $region98: #{tpu_custom_call.1} parent=95 // pred_check_branch
          %1419 = sbr.rel (%p1417) target = $region100
        $region99: #{tpu_custom_call.1} parent=95 // pred_region
          %s1420 = sand.u32 %s218, 1
          %s1421 = scalar_lea.sflag [#allocation6], %s1420
          %s1422 = sand.u32 %s218, 1
          %s1423 = smul.addr %s1422, 32
          %s1424 = scalar_lea.vmem [#allocation13], %s1423
          %1425 = dma.done %s1421, 512
        $region100: #{tpu_custom_call.1} parent=95 // pred_fallthru
          _
      $region96: #{tpu_custom_call.1} parent=5 // pred_fallthru
        _
    $region6: #{tpu_custom_call.1} parent=1 // loop_footer
      %s27 = sadd.s32 1, %s23
    $region7: #{tpu_custom_call.1} parent=1 // loop_footer_branch
      %22 = sbr.rel target = $region3
    $region8: #{tpu_custom_call.1} parent=1 // loop_exit
      _
    %1426 = vsyncpa [#allocation5], 1
    %s1427 = scalar_lea.sflag [#allocation5], 1
    %1428 = vsyncpa %s1427, 1
    %1429 = vsyncpa [#allocation8], 1
    %s1430 = scalar_lea.sflag [#allocation8], 1
    %1431 = vsyncpa %s1430, 1
    %1432 = vsyncpa [#allocation11], 1
    %s1433 = scalar_lea.sflag [#allocation11], 1
    %1434 = vsyncpa %s1433, 1
    %1435 = vsyncpa [#allocation6], 1
    %s1436 = scalar_lea.sflag [#allocation6], 1
    %1437 = vsyncpa %s1436, 1

</llo_original>
